<compile_context>
chip_gen: v6e
topology: v6e:2x2x1
jax: 0.10.0
libtpu: 0.0.40
codegen_flags: <defaults>
</compile_context>

<pallas_src>
import functools
import math

import jax
import jax.numpy as jnp
from jax.experimental import pallas as pl
from jax.experimental.pallas import tpu as pltpu


def _mha_kernel(x_ref, wqkv_ref, bqkv_ref, wo_ref, bo_ref, out_ref, ctx_ref, *, n_heads):
    # x_ref:    (Bt, S, D)  bf16   — Bt (batch*modality) slabs per grid step
    # wqkv_ref: (D, 3*D)    bf16   — [Wq*scale | Wk | Wv], head-major columns
    # bqkv_ref: (1, 3*D)    f32    — [bq*scale | bk | bv]
    # wo_ref:   (D, D)      bf16,  bo_ref: (1, D) f32
    # out_ref:  (Bt, S, D)  (out dtype)
    # ctx_ref:  (Bt*S, D)   bf16 scratch — per-head contexts scattered by lane offset
    bt, s, d = x_ref.shape
    d_k = d // n_heads
    r = bt * s

    x2 = x_ref[...].reshape(r, d)                                           # (R, D) bf16

    # Fused QKV projection: single lane-dense matmul, f32 accumulation.
    qkv = jnp.dot(x2, wqkv_ref[...], preferred_element_type=jnp.float32) + bqkv_ref[...]

    # Static head loop; per-head data comes from static lane slices of `qkv`
    # (no transpose, no concat).  For very large n_heads verify vreg pressure /
    # switch to a fori_loop over a scratch-resident qkv.
    for h in range(n_heads):
        q = qkv[:, h * d_k:(h + 1) * d_k]                     # scale already folded in
        k = qkv[:, d + h * d_k:d + (h + 1) * d_k]
        v = qkv[:, 2 * d + h * d_k:2 * d + (h + 1) * d_k]

        q3 = q.reshape(bt, s, d_k).astype(jnp.bfloat16)
        k3 = k.reshape(bt, s, d_k).astype(jnp.bfloat16)
        v3 = v.reshape(bt, s, d_k).astype(jnp.bfloat16)

        # Batched scores over the slab dim, contracting last dims (no explicit .T).
        sc = jnp.einsum("bqd,bkd->bqk", q3, k3,
                        preferred_element_type=jnp.float32)                 # (Bt, S, S)
        sc = sc - jnp.max(sc, axis=-1, keepdims=True)
        p = jnp.exp(sc)
        attn = p * pl.reciprocal(jnp.sum(p, axis=-1, keepdims=True), approx=True)
        # dropout(attn) -> identity in eval mode.

        ctx = jnp.einsum("bqk,bkd->bqd", attn.astype(jnp.bfloat16), v3,
                         preferred_element_type=jnp.float32)                # (Bt, S, d_k)

        # Scatter this head's context into the concat layout at a static lane offset
        # (cheap masked vst; replaces the per-head K=d_k output matmul).
        ctx_ref[:, h * d_k:(h + 1) * d_k] = ctx.reshape(r, d_k).astype(ctx_ref.dtype)

    # Single dense output projection (K = D -> full MXU contraction fill) + bias.
    out = jnp.dot(ctx_ref[...], wo_ref[...], preferred_element_type=jnp.float32) + bo_ref[...]
    out_ref[...] = out.reshape(bt, s, d).astype(out_ref.dtype)


def _vmem_capacity_bytes():
    try:
        info = pltpu.get_tpu_info()
        return int(getattr(info, "vmem_capacity_bytes", 64 * 1024 * 1024))
    except Exception:
        return 64 * 1024 * 1024          # conservative (v7x per-TC VMEM)


def _choose_block_b(B, seq_len, d_model, vmem_bytes):
    # Rough per-slab bytes: x bf16 (double-buffered) + out f32 (double-buffered)
    # + ctx bf16 scratch + qkv f32 temp + ~2-3 live (S,S) f32 score temporaries.
    per_slab = seq_len * d_model * (2 * 2 + 4 * 2 + 2 + 12) + seq_len * seq_len * 12
    weight_bytes = 2 * (3 * d_model * d_model * 2 + d_model * d_model * 2) + 16 * d_model * 4
    budget = vmem_bytes // 2                                   # leave pipelining headroom
    fit = max(1, (budget - weight_bytes) // per_slab)
    # MXU M-fill target: 256-wide MXUs (v6e/v7x) like >= 256-512 rows per step.
    target_rows = 512
    by_rows = max(1, target_rows // seq_len) if seq_len < target_rows else 1
    block_b = int(max(1, min(B, fit, by_rows)))
    if B > 1:
        block_b = min(block_b, -(-B // 2))                     # keep >= 2 grid steps
        while block_b > 1 and (-(-B // block_b)) % 2 != 0:     # prefer even step count
            block_b -= 1                                       # (v7x: 2 TensorCores)
    return block_b


def multi_attention(x, params, *, n_heads: int, block_b: int | None = None,
                    out_dtype=jnp.float32):
    """x: (batch, n_modalities, seq_len, d_model) -> same shape (out_dtype)."""
    batch, n_mod, seq_len, d_model = x.shape
    assert d_model % n_heads == 0
    d_k = d_model // n_heads
    B = batch * n_mod

    vmem_bytes = _vmem_capacity_bytes()
    if block_b is None:
        block_b = _choose_block_b(B, seq_len, d_model, vmem_bytes)
    num_blocks = -(-B // block_b)
    B_pad = num_blocks * block_b

    # --- activations: flatten, pad, cast to bf16 -----------------------------------
    xf = x.reshape(B, seq_len, d_model).astype(jnp.bfloat16)
    if B_pad != B:
        xf = jnp.pad(xf, ((0, B_pad - B), (0, 0), (0, 0)))

    # --- weights: PyTorch Linear is y = x @ W.T + b (W is (out, in)).  Column j of
    #     W.T feeds head j // d_k, so the natural order already matches the reference
    #     head-split / concat layout.  Fold 1/sqrt(d_k) into Wq and bq. -------------
    scale = 1.0 / math.sqrt(d_k)
    w_qkv = jnp.concatenate(
        [params["wq"].T.astype(jnp.float32) * scale,
         params["wk"].T.astype(jnp.float32),
         params["wv"].T.astype(jnp.float32)], axis=1).astype(jnp.bfloat16)   # (D, 3D)
    b_qkv = jnp.concatenate(
        [params["bq"].astype(jnp.float32) * scale,
         params["bk"].astype(jnp.float32),
         params["bv"].astype(jnp.float32)]).reshape(1, 3 * d_model)          # (1, 3D) f32
    wo = params["wo"].T.astype(jnp.bfloat16)                                 # (D, D)
    bo = params["bo"].reshape(1, d_model).astype(jnp.float32)                # (1, D)

    # Advisory cost estimate (helps XLA overlap the kernel with surrounding ops).
    flops = int(8 * B * seq_len * d_model * d_model + 4 * B * seq_len * seq_len * d_model)
    transcendentals = int(B * n_heads * seq_len * seq_len)
    bytes_accessed = int(B_pad * seq_len * d_model * (2 + jnp.dtype(out_dtype).itemsize)
                         + 4 * d_model * d_model * 2 + 4 * 4 * d_model)

    vmem_limit = int(min(vmem_bytes * 3 // 4, 100 * 1024 * 1024))

    kernel = functools.partial(_mha_kernel, n_heads=n_heads)

    out = pl.pallas_call(
        kernel,
        out_shape=jax.ShapeDtypeStruct((B_pad, seq_len, d_model), out_dtype),
        grid_spec=pltpu.PrefetchScalarGridSpec(
            num_scalar_prefetch=0,
            grid=(num_blocks,),
            in_specs=[
                pl.BlockSpec((block_b, seq_len, d_model), lambda i: (i, 0, 0)),  # x
                pl.BlockSpec((d_model, 3 * d_model), lambda i: (0, 0)),          # w_qkv
                pl.BlockSpec((1, 3 * d_model), lambda i: (0, 0)),                # b_qkv
                pl.BlockSpec((d_model, d_model), lambda i: (0, 0)),              # wo
                pl.BlockSpec((1, d_model), lambda i: (0, 0)),                    # bo
            ],
            out_specs=pl.BlockSpec((block_b, seq_len, d_model), lambda i: (i, 0, 0)),
            scratch_shapes=[pltpu.VMEM((block_b * seq_len, d_model), jnp.bfloat16)],
        ),
        compiler_params=pltpu.CompilerParams(
            dimension_semantics=("parallel",),
            vmem_limit_bytes=vmem_limit,
        ),
        cost_estimate=pl.CostEstimate(
            flops=flops, transcendentals=transcendentals, bytes_accessed=bytes_accessed),
    )(xf, w_qkv, b_qkv, wo, bo)

    return out[:B].reshape(batch, n_mod, seq_len, d_model)


def _init_params(key, d_model):
    ks = jax.random.split(key, 8)
    bound = 1.0 / (d_model ** 0.5)

    def u(k, shape):
        return jax.random.uniform(k, shape, jnp.float32, -bound, bound)

    return {
        "wq": u(ks[0], (d_model, d_model)), "bq": u(ks[1], (d_model,)),
        "wk": u(ks[2], (d_model, d_model)), "bk": u(ks[3], (d_model,)),
        "wv": u(ks[4], (d_model, d_model)), "bv": u(ks[5], (d_model,)),
        "wo": u(ks[6], (d_model, d_model)), "bo": u(ks[7], (d_model,)),
    }


def _reference(x, params, n_heads):
    # Pure-JAX f32 reference mirroring the PyTorch forward (eval mode).
    b, m, s, d = x.shape
    d_k = d // n_heads
    q = x @ params["wq"].T + params["bq"]
    k = x @ params["wk"].T + params["bk"]
    v = x @ params["wv"].T + params["bv"]
    q = q.reshape(b, m, s, n_heads, d_k).transpose(0, 1, 3, 2, 4)
    k = k.reshape(b, m, s, n_heads, d_k).transpose(0, 1, 3, 2, 4)
    v = v.reshape(b, m, s, n_heads, d_k).transpose(0, 1, 3, 2, 4)
    scores = jnp.einsum("bmhqd,bmhkd->bmhqk", q, k) / (d_k ** 0.5)
    attn = jax.nn.softmax(scores, axis=-1)
    ctx = jnp.einsum("bmhqk,bmhkd->bmhqd", attn, v)
    ctx = ctx.transpose(0, 1, 3, 2, 4).reshape(b, m, s, d)
    return ctx @ params["wo"].T + params["bo"]


if __name__ == "__main__":
    # Small shapes consistent with the module (d_model multiple of 128 -> lane-dense).
    batch, n_mod, seq_len, d_model, n_heads = 2, 3, 8, 128, 4

    key = jax.random.PRNGKey(0)
    k_x, k_p = jax.random.split(key)
    x = jax.random.normal(k_x, (batch, n_mod, seq_len, d_model), jnp.float32)
    params = _init_params(k_p, d_model)

    out = multi_attention(x, params, n_heads=n_heads)
    out = jax.block_until_ready(out)

    ref = _reference(x, params, n_heads)
    assert out.shape == (batch, n_mod, seq_len, d_model)
    # bf16 matmul inputs (f32 accumulation) + approx reciprocal -> looser tolerance.
    assert jnp.allclose(out, ref, atol=5e-2, rtol=5e-2), "mismatch vs reference"

    print("KERNEL_OK")
</pallas_src>

<mosaic_0001>
module attributes {stable_mosaic.version = 11 : i64} {
  func.func @_mha_kernel(%arg0: i32, %arg1: memref<3x8x128xbf16, #tpu.memory_space<vmem>>, %arg2: memref<128x384xbf16, #tpu.memory_space<vmem>>, %arg3: memref<1x384xf32, #tpu.memory_space<vmem>>, %arg4: memref<128x128xbf16, #tpu.memory_space<vmem>>, %arg5: memref<1x128xf32, #tpu.memory_space<vmem>>, %arg6: memref<3x8x128xf32, #tpu.memory_space<vmem>>, %arg7: memref<24x128xbf16, #tpu.memory_space<vmem>>) attributes {dimension_semantics = [#tpu.dimension_semantics<parallel>], iteration_bounds = array<i64: 2>, scalar_prefetch = 0 : i64, scratch_operands = 1 : i64, tpu.core_type = #tpu.core_type<tc>, window_params = [{transform_indices = @transform_0, window_bounds = array<i64: 3, 8, 128>}, {pipeline_mode = #tpu.pipeline_mode<synchronous>, transform_indices = @transform_1, window_bounds = array<i64: 128, 384>}, {pipeline_mode = #tpu.pipeline_mode<synchronous>, transform_indices = @transform_2, window_bounds = array<i64: 1, 384>}, {pipeline_mode = #tpu.pipeline_mode<synchronous>, transform_indices = @transform_3, window_bounds = array<i64: 128, 128>}, {pipeline_mode = #tpu.pipeline_mode<synchronous>, transform_indices = @transform_4, window_bounds = array<i64: 1, 128>}, {transform_indices = @transform_5, window_bounds = array<i64: 3, 8, 128>}]} {
    %c0 = arith.constant 0 : index
    %c0_0 = arith.constant 0 : index
    %c0_1 = arith.constant 0 : index
    %0 = vector.load %arg1[%c0, %c0_0, %c0_1] : memref<3x8x128xbf16, #tpu.memory_space<vmem>>, vector<3x8x128xbf16>
    %1 = vector.shape_cast %0 : vector<3x8x128xbf16> to vector<24x128xbf16>
    %c0_2 = arith.constant 0 : index
    %c0_3 = arith.constant 0 : index
    %2 = vector.load %arg2[%c0_2, %c0_3] : memref<128x384xbf16, #tpu.memory_space<vmem>>, vector<128x384xbf16>
    %cst = arith.constant dense<0.000000e+00> : vector<24x384xf32>
    %3 = tpu.matmul %1, %2, %cst {dimension_numbers = #tpu.dot_dimension_numbers<[1], [0], [0], [1], [0, 0, 1, 1], [], []>} : vector<24x128xbf16>, vector<128x384xbf16>, vector<24x384xf32> -> vector<24x384xf32>
    %c0_4 = arith.constant 0 : index
    %c0_5 = arith.constant 0 : index
    %4 = vector.load %arg3[%c0_4, %c0_5] : memref<1x384xf32, #tpu.memory_space<vmem>>, vector<1x384xf32>
    %5 = vector.broadcast %4 : vector<1x384xf32> to vector<24x384xf32>
    %6 = arith.addf %3, %5 : vector<24x384xf32>
    %7 = vector.extract_strided_slice %6 {offsets = [0, 0], sizes = [24, 32], strides = [1, 1]} : vector<24x384xf32> to vector<24x32xf32>
    %8 = vector.extract_strided_slice %6 {offsets = [0, 128], sizes = [24, 32], strides = [1, 1]} : vector<24x384xf32> to vector<24x32xf32>
    %9 = vector.extract_strided_slice %6 {offsets = [0, 256], sizes = [24, 32], strides = [1, 1]} : vector<24x384xf32> to vector<24x32xf32>
    %10 = vector.shape_cast %7 : vector<24x32xf32> to vector<3x8x32xf32>
    %11 = arith.truncf %10 : vector<3x8x32xf32> to vector<3x8x32xbf16>
    %12 = vector.shape_cast %8 : vector<24x32xf32> to vector<3x8x32xf32>
    %13 = arith.truncf %12 : vector<3x8x32xf32> to vector<3x8x32xbf16>
    %14 = vector.shape_cast %9 : vector<24x32xf32> to vector<3x8x32xf32>
    %15 = arith.truncf %14 : vector<3x8x32xf32> to vector<3x8x32xbf16>
    "tpu.trace_start"() <{level = 10 : i32, message = "bqd,bkd->bqk"}> : () -> ()
    %cst_6 = arith.constant dense<0.000000e+00> : vector<3x8x8xf32>
    %16 = tpu.matmul %11, %13, %cst_6 {dimension_numbers = #tpu.dot_dimension_numbers<[2], [2], [1], [1], [0, 0, 0, 1, 1, 1], [0], [0]>} : vector<3x8x32xbf16>, vector<3x8x32xbf16>, vector<3x8x8xf32> -> vector<3x8x8xf32>
    "tpu.trace_stop"() : () -> ()
    %cst_7 = arith.constant dense<0xFF800000> : vector<3x8xf32>
    %17 = vector.multi_reduction <maximumf>, %16, %cst_7 [2] : vector<3x8x8xf32> to vector<3x8xf32>
    %18 = vector.shape_cast %17 : vector<3x8xf32> to vector<3x8x1xf32>
    %19 = vector.broadcast %18 : vector<3x8x1xf32> to vector<3x8x8xf32>
    %20 = arith.subf %16, %19 : vector<3x8x8xf32>
    %21 = math.exp %20 : vector<3x8x8xf32>
    %cst_8 = arith.constant dense<0.000000e+00> : vector<3x8xf32>
    %22 = vector.multi_reduction <add>, %21, %cst_8 [2] : vector<3x8x8xf32> to vector<3x8xf32>
    %23 = vector.shape_cast %22 : vector<3x8xf32> to vector<3x8x1xf32>
    %24 = tpu.reciprocal %23 {approx = true} : vector<3x8x1xf32> -> vector<3x8x1xf32>
    %25 = vector.broadcast %24 : vector<3x8x1xf32> to vector<3x8x8xf32>
    %26 = arith.mulf %21, %25 : vector<3x8x8xf32>
    %27 = arith.truncf %26 : vector<3x8x8xf32> to vector<3x8x8xbf16>
    "tpu.trace_start"() <{level = 10 : i32, message = "bqk,bkd->bqd"}> : () -> ()
    %cst_9 = arith.constant dense<0.000000e+00> : vector<3x8x32xf32>
    %28 = tpu.matmul %27, %15, %cst_9 {dimension_numbers = #tpu.dot_dimension_numbers<[2], [1], [1], [2], [0, 0, 0, 1, 1, 2], [0], [0]>} : vector<3x8x8xbf16>, vector<3x8x32xbf16>, vector<3x8x32xf32> -> vector<3x8x32xf32>
    "tpu.trace_stop"() : () -> ()
    %29 = vector.shape_cast %28 : vector<3x8x32xf32> to vector<24x32xf32>
    %30 = arith.truncf %29 : vector<24x32xf32> to vector<24x32xbf16>
    %c0_10 = arith.constant 0 : index
    %c0_11 = arith.constant 0 : index
    %31 = vector.load %arg7[%c0_10, %c0_11] : memref<24x128xbf16, #tpu.memory_space<vmem>>, vector<24x32xbf16>
    tpu.vector_store %arg7[%c0_10, %c0_11], %30 {strides = array<i32>} : memref<24x128xbf16, #tpu.memory_space<vmem>>, vector<24x32xbf16>,
    %32 = vector.extract_strided_slice %6 {offsets = [0, 32], sizes = [24, 32], strides = [1, 1]} : vector<24x384xf32> to vector<24x32xf32>
    %33 = vector.extract_strided_slice %6 {offsets = [0, 160], sizes = [24, 32], strides = [1, 1]} : vector<24x384xf32> to vector<24x32xf32>
    %34 = vector.extract_strided_slice %6 {offsets = [0, 288], sizes = [24, 32], strides = [1, 1]} : vector<24x384xf32> to vector<24x32xf32>
    %35 = vector.shape_cast %32 : vector<24x32xf32> to vector<3x8x32xf32>
    %36 = arith.truncf %35 : vector<3x8x32xf32> to vector<3x8x32xbf16>
    %37 = vector.shape_cast %33 : vector<24x32xf32> to vector<3x8x32xf32>
    %38 = arith.truncf %37 : vector<3x8x32xf32> to vector<3x8x32xbf16>
    %39 = vector.shape_cast %34 : vector<24x32xf32> to vector<3x8x32xf32>
    %40 = arith.truncf %39 : vector<3x8x32xf32> to vector<3x8x32xbf16>
    "tpu.trace_start"() <{level = 10 : i32, message = "bqd,bkd->bqk"}> : () -> ()
    %cst_12 = arith.constant dense<0.000000e+00> : vector<3x8x8xf32>
    %41 = tpu.matmul %36, %38, %cst_12 {dimension_numbers = #tpu.dot_dimension_numbers<[2], [2], [1], [1], [0, 0, 0, 1, 1, 1], [0], [0]>} : vector<3x8x32xbf16>, vector<3x8x32xbf16>, vector<3x8x8xf32> -> vector<3x8x8xf32>
    "tpu.trace_stop"() : () -> ()
    %cst_13 = arith.constant dense<0xFF800000> : vector<3x8xf32>
    %42 = vector.multi_reduction <maximumf>, %41, %cst_13 [2] : vector<3x8x8xf32> to vector<3x8xf32>
    %43 = vector.shape_cast %42 : vector<3x8xf32> to vector<3x8x1xf32>
    %44 = vector.broadcast %43 : vector<3x8x1xf32> to vector<3x8x8xf32>
    %45 = arith.subf %41, %44 : vector<3x8x8xf32>
    %46 = math.exp %45 : vector<3x8x8xf32>
    %cst_14 = arith.constant dense<0.000000e+00> : vector<3x8xf32>
    %47 = vector.multi_reduction <add>, %46, %cst_14 [2] : vector<3x8x8xf32> to vector<3x8xf32>
    %48 = vector.shape_cast %47 : vector<3x8xf32> to vector<3x8x1xf32>
    %49 = tpu.reciprocal %48 {approx = true} : vector<3x8x1xf32> -> vector<3x8x1xf32>
    %50 = vector.broadcast %49 : vector<3x8x1xf32> to vector<3x8x8xf32>
    %51 = arith.mulf %46, %50 : vector<3x8x8xf32>
    %52 = arith.truncf %51 : vector<3x8x8xf32> to vector<3x8x8xbf16>
    "tpu.trace_start"() <{level = 10 : i32, message = "bqk,bkd->bqd"}> : () -> ()
    %cst_15 = arith.constant dense<0.000000e+00> : vector<3x8x32xf32>
    %53 = tpu.matmul %52, %40, %cst_15 {dimension_numbers = #tpu.dot_dimension_numbers<[2], [1], [1], [2], [0, 0, 0, 1, 1, 2], [0], [0]>} : vector<3x8x8xbf16>, vector<3x8x32xbf16>, vector<3x8x32xf32> -> vector<3x8x32xf32>
    "tpu.trace_stop"() : () -> ()
    %54 = vector.shape_cast %53 : vector<3x8x32xf32> to vector<24x32xf32>
    %55 = arith.truncf %54 : vector<24x32xf32> to vector<24x32xbf16>
    %c0_16 = arith.constant 0 : index
    %c32 = arith.constant 32 : index
    %56 = vector.load %arg7[%c0_16, %c32] : memref<24x128xbf16, #tpu.memory_space<vmem>>, vector<24x32xbf16>
    tpu.vector_store %arg7[%c0_16, %c32], %55 {strides = array<i32>} : memref<24x128xbf16, #tpu.memory_space<vmem>>, vector<24x32xbf16>,
    %57 = vector.extract_strided_slice %6 {offsets = [0, 64], sizes = [24, 32], strides = [1, 1]} : vector<24x384xf32> to vector<24x32xf32>
    %58 = vector.extract_strided_slice %6 {offsets = [0, 192], sizes = [24, 32], strides = [1, 1]} : vector<24x384xf32> to vector<24x32xf32>
    %59 = vector.extract_strided_slice %6 {offsets = [0, 320], sizes = [24, 32], strides = [1, 1]} : vector<24x384xf32> to vector<24x32xf32>
    %60 = vector.shape_cast %57 : vector<24x32xf32> to vector<3x8x32xf32>
    %61 = arith.truncf %60 : vector<3x8x32xf32> to vector<3x8x32xbf16>
    %62 = vector.shape_cast %58 : vector<24x32xf32> to vector<3x8x32xf32>
    %63 = arith.truncf %62 : vector<3x8x32xf32> to vector<3x8x32xbf16>
    %64 = vector.shape_cast %59 : vector<24x32xf32> to vector<3x8x32xf32>
    %65 = arith.truncf %64 : vector<3x8x32xf32> to vector<3x8x32xbf16>
    "tpu.trace_start"() <{level = 10 : i32, message = "bqd,bkd->bqk"}> : () -> ()
    %cst_17 = arith.constant dense<0.000000e+00> : vector<3x8x8xf32>
    %66 = tpu.matmul %61, %63, %cst_17 {dimension_numbers = #tpu.dot_dimension_numbers<[2], [2], [1], [1], [0, 0, 0, 1, 1, 1], [0], [0]>} : vector<3x8x32xbf16>, vector<3x8x32xbf16>, vector<3x8x8xf32> -> vector<3x8x8xf32>
    "tpu.trace_stop"() : () -> ()
    %cst_18 = arith.constant dense<0xFF800000> : vector<3x8xf32>
    %67 = vector.multi_reduction <maximumf>, %66, %cst_18 [2] : vector<3x8x8xf32> to vector<3x8xf32>
    %68 = vector.shape_cast %67 : vector<3x8xf32> to vector<3x8x1xf32>
    %69 = vector.broadcast %68 : vector<3x8x1xf32> to vector<3x8x8xf32>
    %70 = arith.subf %66, %69 : vector<3x8x8xf32>
    %71 = math.exp %70 : vector<3x8x8xf32>
    %cst_19 = arith.constant dense<0.000000e+00> : vector<3x8xf32>
    %72 = vector.multi_reduction <add>, %71, %cst_19 [2] : vector<3x8x8xf32> to vector<3x8xf32>
    %73 = vector.shape_cast %72 : vector<3x8xf32> to vector<3x8x1xf32>
    %74 = tpu.reciprocal %73 {approx = true} : vector<3x8x1xf32> -> vector<3x8x1xf32>
    %75 = vector.broadcast %74 : vector<3x8x1xf32> to vector<3x8x8xf32>
    %76 = arith.mulf %71, %75 : vector<3x8x8xf32>
    %77 = arith.truncf %76 : vector<3x8x8xf32> to vector<3x8x8xbf16>
    "tpu.trace_start"() <{level = 10 : i32, message = "bqk,bkd->bqd"}> : () -> ()
    %cst_20 = arith.constant dense<0.000000e+00> : vector<3x8x32xf32>
    %78 = tpu.matmul %77, %65, %cst_20 {dimension_numbers = #tpu.dot_dimension_numbers<[2], [1], [1], [2], [0, 0, 0, 1, 1, 2], [0], [0]>} : vector<3x8x8xbf16>, vector<3x8x32xbf16>, vector<3x8x32xf32> -> vector<3x8x32xf32>
    "tpu.trace_stop"() : () -> ()
    %79 = vector.shape_cast %78 : vector<3x8x32xf32> to vector<24x32xf32>
    %80 = arith.truncf %79 : vector<24x32xf32> to vector<24x32xbf16>
    %c0_21 = arith.constant 0 : index
    %c64 = arith.constant 64 : index
    %81 = vector.load %arg7[%c0_21, %c64] : memref<24x128xbf16, #tpu.memory_space<vmem>>, vector<24x32xbf16>
    tpu.vector_store %arg7[%c0_21, %c64], %80 {strides = array<i32>} : memref<24x128xbf16, #tpu.memory_space<vmem>>, vector<24x32xbf16>,
    %82 = vector.extract_strided_slice %6 {offsets = [0, 96], sizes = [24, 32], strides = [1, 1]} : vector<24x384xf32> to vector<24x32xf32>
    %83 = vector.extract_strided_slice %6 {offsets = [0, 224], sizes = [24, 32], strides = [1, 1]} : vector<24x384xf32> to vector<24x32xf32>
    %84 = vector.extract_strided_slice %6 {offsets = [0, 352], sizes = [24, 32], strides = [1, 1]} : vector<24x384xf32> to vector<24x32xf32>
    %85 = vector.shape_cast %82 : vector<24x32xf32> to vector<3x8x32xf32>
    %86 = arith.truncf %85 : vector<3x8x32xf32> to vector<3x8x32xbf16>
    %87 = vector.shape_cast %83 : vector<24x32xf32> to vector<3x8x32xf32>
    %88 = arith.truncf %87 : vector<3x8x32xf32> to vector<3x8x32xbf16>
    %89 = vector.shape_cast %84 : vector<24x32xf32> to vector<3x8x32xf32>
    %90 = arith.truncf %89 : vector<3x8x32xf32> to vector<3x8x32xbf16>
    "tpu.trace_start"() <{level = 10 : i32, message = "bqd,bkd->bqk"}> : () -> ()
    %cst_22 = arith.constant dense<0.000000e+00> : vector<3x8x8xf32>
    %91 = tpu.matmul %86, %88, %cst_22 {dimension_numbers = #tpu.dot_dimension_numbers<[2], [2], [1], [1], [0, 0, 0, 1, 1, 1], [0], [0]>} : vector<3x8x32xbf16>, vector<3x8x32xbf16>, vector<3x8x8xf32> -> vector<3x8x8xf32>
    "tpu.trace_stop"() : () -> ()
    %cst_23 = arith.constant dense<0xFF800000> : vector<3x8xf32>
    %92 = vector.multi_reduction <maximumf>, %91, %cst_23 [2] : vector<3x8x8xf32> to vector<3x8xf32>
    %93 = vector.shape_cast %92 : vector<3x8xf32> to vector<3x8x1xf32>
    %94 = vector.broadcast %93 : vector<3x8x1xf32> to vector<3x8x8xf32>
    %95 = arith.subf %91, %94 : vector<3x8x8xf32>
    %96 = math.exp %95 : vector<3x8x8xf32>
    %cst_24 = arith.constant dense<0.000000e+00> : vector<3x8xf32>
    %97 = vector.multi_reduction <add>, %96, %cst_24 [2] : vector<3x8x8xf32> to vector<3x8xf32>
    %98 = vector.shape_cast %97 : vector<3x8xf32> to vector<3x8x1xf32>
    %99 = tpu.reciprocal %98 {approx = true} : vector<3x8x1xf32> -> vector<3x8x1xf32>
    %100 = vector.broadcast %99 : vector<3x8x1xf32> to vector<3x8x8xf32>
    %101 = arith.mulf %96, %100 : vector<3x8x8xf32>
    %102 = arith.truncf %101 : vector<3x8x8xf32> to vector<3x8x8xbf16>
    "tpu.trace_start"() <{level = 10 : i32, message = "bqk,bkd->bqd"}> : () -> ()
    %cst_25 = arith.constant dense<0.000000e+00> : vector<3x8x32xf32>
    %103 = tpu.matmul %102, %90, %cst_25 {dimension_numbers = #tpu.dot_dimension_numbers<[2], [1], [1], [2], [0, 0, 0, 1, 1, 2], [0], [0]>} : vector<3x8x8xbf16>, vector<3x8x32xbf16>, vector<3x8x32xf32> -> vector<3x8x32xf32>
    "tpu.trace_stop"() : () -> ()
    %104 = vector.shape_cast %103 : vector<3x8x32xf32> to vector<24x32xf32>
    %105 = arith.truncf %104 : vector<24x32xf32> to vector<24x32xbf16>
    %c0_26 = arith.constant 0 : index
    %c96 = arith.constant 96 : index
    %106 = vector.load %arg7[%c0_26, %c96] : memref<24x128xbf16, #tpu.memory_space<vmem>>, vector<24x32xbf16>
    tpu.vector_store %arg7[%c0_26, %c96], %105 {strides = array<i32>} : memref<24x128xbf16, #tpu.memory_space<vmem>>, vector<24x32xbf16>,
    %c0_27 = arith.constant 0 : index
    %c0_28 = arith.constant 0 : index
    %107 = vector.load %arg7[%c0_27, %c0_28] : memref<24x128xbf16, #tpu.memory_space<vmem>>, vector<24x128xbf16>
    %c0_29 = arith.constant 0 : index
    %c0_30 = arith.constant 0 : index
    %108 = vector.load %arg4[%c0_29, %c0_30] : memref<128x128xbf16, #tpu.memory_space<vmem>>, vector<128x128xbf16>
    %cst_31 = arith.constant dense<0.000000e+00> : vector<24x128xf32>
    %109 = tpu.matmul %107, %108, %cst_31 {dimension_numbers = #tpu.dot_dimension_numbers<[1], [0], [0], [1], [0, 0, 1, 1], [], []>} : vector<24x128xbf16>, vector<128x128xbf16>, vector<24x128xf32> -> vector<24x128xf32>
    %c0_32 = arith.constant 0 : index
    %c0_33 = arith.constant 0 : index
    %110 = vector.load %arg5[%c0_32, %c0_33] : memref<1x128xf32, #tpu.memory_space<vmem>>, vector<1x128xf32>
    %111 = vector.broadcast %110 : vector<1x128xf32> to vector<24x128xf32>
    %112 = arith.addf %109, %111 : vector<24x128xf32>
    %113 = vector.shape_cast %112 : vector<24x128xf32> to vector<3x8x128xf32>
    %c0_34 = arith.constant 0 : index
    %c0_35 = arith.constant 0 : index
    %c0_36 = arith.constant 0 : index
    %114 = vector.load %arg6[%c0_34, %c0_35, %c0_36] : memref<3x8x128xf32, #tpu.memory_space<vmem>>, vector<3x8x128xf32>
    tpu.vector_store %arg6[%c0_34, %c0_35, %c0_36], %113 {strides = array<i32>} : memref<3x8x128xf32, #tpu.memory_space<vmem>>, vector<3x8x128xf32>,
    return
  }
  func.func @transform_0(%arg0: i32) -> (i32, i32, i32) {
    %c0_i32 = arith.constant 0 : i32
    %c0_i32_0 = arith.constant 0 : i32
    %c0_i32_1 = arith.constant 0 : i32
    return %arg0, %c0_i32, %c0_i32_0 : i32, i32, i32
  }
  func.func @transform_1(%arg0: i32) -> (i32, i32) {
    %c0_i32 = arith.constant 0 : i32
    %c0_i32_0 = arith.constant 0 : i32
    %c0_i32_1 = arith.constant 0 : i32
    return %c0_i32, %c0_i32_0 : i32, i32
  }
  func.func @transform_2(%arg0: i32) -> (i32, i32) {
    %c0_i32 = arith.constant 0 : i32
    %c0_i32_0 = arith.constant 0 : i32
    %c0_i32_1 = arith.constant 0 : i32
    return %c0_i32, %c0_i32_0 : i32, i32
  }
  func.func @transform_3(%arg0: i32) -> (i32, i32) {
    %c0_i32 = arith.constant 0 : i32
    %c0_i32_0 = arith.constant 0 : i32
    %c0_i32_1 = arith.constant 0 : i32
    return %c0_i32, %c0_i32_0 : i32, i32
  }
  func.func @transform_4(%arg0: i32) -> (i32, i32) {
    %c0_i32 = arith.constant 0 : i32
    %c0_i32_0 = arith.constant 0 : i32
    %c0_i32_1 = arith.constant 0 : i32
    return %c0_i32, %c0_i32_0 : i32, i32
  }
  func.func @transform_5(%arg0: i32) -> (i32, i32, i32) {
    %c0_i32 = arith.constant 0 : i32
    %c0_i32_0 = arith.constant 0 : i32
    %c0_i32_1 = arith.constant 0 : i32
    return %arg0, %c0_i32, %c0_i32_0 : i32, i32, i32
  }
}

</mosaic_0001>

<llo_original>
// kernel: tpu_custom_call.1
$region0: #{tpu_custom_call.1}
  #allocation0 [shape = 'u32[]', space=smem, size = 0x4, offset = 0x4, fixed_abs, tag = 'smem constant byte address 0x4 - core index']
  #allocation1 [shape = 'u32[144,128]{1,0:T(1,128)}', space=vmem, size = 0x12000, scoped, tag = 'internal scratch']
  #allocation2 [shape = 'bf16[24,128]{1,0:T(8,128)(2,1)}', space=vmem, size = 0x1800, scoped, tag = 'scratch operand']
  %s0 = inlined_call_operand.hbm [shape: bf16[6,8,128], index: 0, kind: input, shape index: {}]
  %s1 = inlined_call_operand.hbm [shape: bf16[128,384], index: 1, kind: input, shape index: {}]
  %s2 = inlined_call_operand.vmem [shape: f32[1,384], index: 2, kind: input, shape index: {}]
  %s3 = inlined_call_operand.hbm [shape: bf16[128,128], index: 3, kind: input, shape index: {}]
  %s4 = inlined_call_operand.vmem [shape: f32[1,128], index: 4, kind: input, shape index: {}]
  %s5 = inlined_call_operand.hbm [shape: f32[6,8,128], index: 5, kind: output, shape index: {}]
  %s6 = sld [smem:[#allocation0]]
  $region65: #{tpu_custom_call.1} parent=0
    _
  %s8 = ssub.s32 1, %s6
  %s9 = scalar_select 0, %s8, %s6
  $region1: #{tpu_custom_call.1} parent=0
    #allocation3 [shape = 'u8[12288]{0}', space=vmem, size = 0x3000, scoped, tag = 'input window, operand 0']
    #allocation4 [shape = 's32[2]{0}', space=sflag, size = 0x8, scoped, tag = 'scoped memory for tpu_custom_call.1']
    #allocation5 [shape = 's32[2]{0}', space=sflag, size = 0x8, scoped, tag = 'scoped memory for tpu_custom_call.1']
    #allocation6 [shape = 'u8[98304]{0}', space=vmem, size = 0x18000, scoped, tag = 'input window, operand 1, single buffered']
    #allocation7 [shape = 's32[1]{0}', space=sflag, size = 0x4, scoped, tag = 'scoped memory for tpu_custom_call.1']
    #allocation8 [shape = 'u8[32768]{0}', space=vmem, size = 0x8000, scoped, tag = 'input window, operand 3, single buffered']
    #allocation9 [shape = 'u8[24576]{0}', space=vmem, size = 0x6000, scoped, tag = 'output window, operand 0']
    %10 = vsyncpa [#allocation4], 0
    %s11 = scalar_lea.sflag [#allocation4], 1
    %12 = vsyncpa %s11, 0
    %13 = vsyncpa [#allocation7], 0
    %14 = vsyncpa [#allocation5], 0
    %s15 = scalar_lea.sflag [#allocation5], 1
    %16 = vsyncpa %s15, 0
    loop: start=0, step=1, limit=4
    $region2: #{tpu_custom_call.1} parent=1 // loop_pre_header
      _
    $region3: #{tpu_custom_call.1} parent=1 // loop_header
      %s18 = sphi 0, %s22
      %p19 = scmp.ge.s32.totalorder %s18, 4
      %s28 = sphi 0, %s30
      %s31 = sphi 0, %s28
      %s32 = sphi 0, %s31
      %s48 = sphi 0, %s32
      %s52 = sphi 0, %s52
      %s54 = sphi 0, %s52
      %s55 = sphi 0, %s54
      %s69 = sphi 0, %s55
      %s73 = sphi 0, %s73
      %s75 = sphi 0, %s73
      %s76 = sphi 0, %s75
      %s90 = sphi 0, %s76
      %s94 = sphi 0, %s94
      %s96 = sphi 0, %s94
      %s97 = sphi 0, %s96
      %s111 = sphi 0, %s97
      %s115 = sphi 0, %s115
      %s117 = sphi 0, %s115
      %s118 = sphi 0, %s117
      %s132 = sphi 0, %s118
      %s138 = sphi 0, %s140
      %s141 = sphi 0, %s138
      %s142 = sphi 0, %s141
      %s158 = sphi 0, %s142
    $region4: #{tpu_custom_call.1} parent=1 // loop_header_branch
      %21 = sbr.rel (%p19) target = $region8
    $region5: #{tpu_custom_call.1} parent=1 // loop_body
      %s23 = ssub.s32 %s18, 1
      %s24 = ssub.s32 %s18, 2
      %s25 = sadd.s32 %s18, 1
      %s26 = ssub.s32 %s18, %s25
      %p27 = scmp.eq.s32.totalorder %s26, 0
      %s29 = sadd.s32 %s28, 1
      %s30 = scalar_select %p27, %s28, %s29
      %p33 = pneg %p27
      %p34 = scmp.eq.s32.totalorder %s18, 1
      %p35 = por %p33, %p34
      %p36 = scmp.ne.s32.totalorder %s28, %s31
      %p37 = scmp.eq.s32.totalorder %s18, 0
      %p38 = por %p36, %p37
      %p39 = scmp.ne.s32.totalorder %s28, %s31
      %p40 = scmp.eq.s32.totalorder %s23, 1
      %p41 = por %p39, %p40
      %p42 = scmp.ne.s32.totalorder %s31, %s32
      %p43 = scmp.eq.s32.totalorder %s23, 0
      %p44 = por %p42, %p43
      %p45 = scmp.ne.s32.totalorder %s31, %s32
      %p46 = scmp.eq.s32.totalorder %s24, 1
      %p47 = por %p45, %p46
      %p49 = scmp.ne.s32.totalorder %s32, %s48
      %p50 = scmp.eq.s32.totalorder %s24, 0
      %p51 = por %p49, %p50
      %s53 = sadd.s32 %s52, 1
      %p56 = scmp.eq.s32.totalorder %s18, 1
      %p57 = scmp.ne.s32.totalorder %s52, %s54
      %p58 = scmp.eq.s32.totalorder %s18, 0
      %p59 = por %p57, %p58
      %p60 = scmp.ne.s32.totalorder %s52, %s54
      %p61 = scmp.eq.s32.totalorder %s23, 1
      %p62 = por %p60, %p61
      %p63 = scmp.ne.s32.totalorder %s54, %s55
      %p64 = scmp.eq.s32.totalorder %s23, 0
      %p65 = por %p63, %p64
      %p66 = scmp.ne.s32.totalorder %s54, %s55
      %p67 = scmp.eq.s32.totalorder %s24, 1
      %p68 = por %p66, %p67
      %p70 = scmp.ne.s32.totalorder %s55, %s69
      %p71 = scmp.eq.s32.totalorder %s24, 0
      %p72 = por %p70, %p71
      %s74 = sadd.s32 %s73, 1
      %p77 = scmp.eq.s32.totalorder %s18, 1
      %p78 = scmp.ne.s32.totalorder %s73, %s75
      %p79 = scmp.eq.s32.totalorder %s18, 0
      %p80 = por %p78, %p79
      %p81 = scmp.ne.s32.totalorder %s73, %s75
      %p82 = scmp.eq.s32.totalorder %s23, 1
      %p83 = por %p81, %p82
      %p84 = scmp.ne.s32.totalorder %s75, %s76
      %p85 = scmp.eq.s32.totalorder %s23, 0
      %p86 = por %p84, %p85
      %p87 = scmp.ne.s32.totalorder %s75, %s76
      %p88 = scmp.eq.s32.totalorder %s24, 1
      %p89 = por %p87, %p88
      %p91 = scmp.ne.s32.totalorder %s76, %s90
      %p92 = scmp.eq.s32.totalorder %s24, 0
      %p93 = por %p91, %p92
      %s95 = sadd.s32 %s94, 1
      %p98 = scmp.eq.s32.totalorder %s18, 1
      %p99 = scmp.ne.s32.totalorder %s94, %s96
      %p100 = scmp.eq.s32.totalorder %s18, 0
      %p101 = por %p99, %p100
      %p102 = scmp.ne.s32.totalorder %s94, %s96
      %p103 = scmp.eq.s32.totalorder %s23, 1
      %p104 = por %p102, %p103
      %p105 = scmp.ne.s32.totalorder %s96, %s97
      %p106 = scmp.eq.s32.totalorder %s23, 0
      %p107 = por %p105, %p106
      %p108 = scmp.ne.s32.totalorder %s96, %s97
      %p109 = scmp.eq.s32.totalorder %s24, 1
      %p110 = por %p108, %p109
      %p112 = scmp.ne.s32.totalorder %s97, %s111
      %p113 = scmp.eq.s32.totalorder %s24, 0
      %p114 = por %p112, %p113
      %s116 = sadd.s32 %s115, 1
      %p119 = scmp.eq.s32.totalorder %s18, 1
      %p120 = scmp.ne.s32.totalorder %s115, %s117
      %p121 = scmp.eq.s32.totalorder %s18, 0
      %p122 = por %p120, %p121
      %p123 = scmp.ne.s32.totalorder %s115, %s117
      %p124 = scmp.eq.s32.totalorder %s23, 1
      %p125 = por %p123, %p124
      %p126 = scmp.ne.s32.totalorder %s117, %s118
      %p127 = scmp.eq.s32.totalorder %s23, 0
      %p128 = por %p126, %p127
      %p129 = scmp.ne.s32.totalorder %s117, %s118
      %p130 = scmp.eq.s32.totalorder %s24, 1
      %p131 = por %p129, %p130
      %p133 = scmp.ne.s32.totalorder %s118, %s132
      %p134 = scmp.eq.s32.totalorder %s24, 0
      %p135 = por %p133, %p134
      %s136 = ssub.s32 %s18, %s25
      %p137 = scmp.eq.s32.totalorder %s136, 0
      %s139 = sadd.s32 %s138, 1
      %s140 = scalar_select %p137, %s138, %s139
      %p143 = pneg %p137
      %p144 = scmp.eq.s32.totalorder %s18, 1
      %p145 = por %p143, %p144
      %p146 = scmp.ne.s32.totalorder %s138, %s141
      %p147 = scmp.eq.s32.totalorder %s18, 0
      %p148 = por %p146, %p147
      %p149 = scmp.ne.s32.totalorder %s138, %s141
      %p150 = scmp.eq.s32.totalorder %s23, 1
      %p151 = por %p149, %p150
      %p152 = scmp.ne.s32.totalorder %s141, %s142
      %p153 = scmp.eq.s32.totalorder %s23, 0
      %p154 = por %p152, %p153
      %p155 = scmp.ne.s32.totalorder %s141, %s142
      %p156 = scmp.eq.s32.totalorder %s24, 1
      %p157 = por %p155, %p156
      %p159 = scmp.ne.s32.totalorder %s142, %s158
      %p160 = scmp.eq.s32.totalorder %s24, 0
      %p161 = por %p159, %p160
      %p162 = scmp.le.s32.totalorder 1, %s18
      %p163 = scmp.lt.s32.totalorder %s18, 3
      %p164 = pnand %p162, %p163
      %p165 = pneg %p164
      // Predicated region
      $region9: #{tpu_custom_call.1} parent=5 // pred_check
        _
      $region10: #{tpu_custom_call.1} parent=5 // pred_check_branch
        %167 = sbr.rel (%p164) target = $region12
      $region11: #{tpu_custom_call.1} parent=5 // pred_region
        %s168 = ssub.s32 %s18, 1
        // Predicated region
        $region13: #{tpu_custom_call.1} parent=11 // pred_check
          %p169 = pneg %p65
        $region14: #{tpu_custom_call.1} parent=11 // pred_check_branch
          %171 = sbr.rel (%p169) target = $region16
        $region15: #{tpu_custom_call.1} parent=11 // pred_region
          %s173 = ssub.s32 3072, 3072
          %174 = vsyncadd [#allocation7], %s173
          %s175 = sshll.u32 [#allocation6], 4
          %s176 = int_to_ptr.vmem [resolvable:$true] %s175
          %181 = dma.hbm_to_vmem [thread:$0]  %s1, 3072, %s176, [#allocation7], 192, 192, 12
        $region16: #{tpu_custom_call.1} parent=11 // pred_fallthru
          _
        // Predicated region
        $region17: #{tpu_custom_call.1} parent=11 // pred_check
          %p182 = pneg %p86
        $region18: #{tpu_custom_call.1} parent=11 // pred_check_branch
          %184 = sbr.rel (%p182) target = $region20
        $region19: #{tpu_custom_call.1} parent=11 // pred_region
          _
        $region20: #{tpu_custom_call.1} parent=11 // pred_fallthru
          _
        // Predicated region
        $region21: #{tpu_custom_call.1} parent=11 // pred_check
          %p185 = pneg %p107
        $region22: #{tpu_custom_call.1} parent=11 // pred_check_branch
          %187 = sbr.rel (%p185) target = $region24
        $region23: #{tpu_custom_call.1} parent=11 // pred_region
          %s189 = ssub.s32 1024, 1024
          %190 = vsyncadd [#allocation7], %s189
          %s191 = sshll.u32 [#allocation8], 4
          %s192 = int_to_ptr.vmem [resolvable:$true] %s191
          %197 = dma.hbm_to_vmem [thread:$0]  %s3, 1024, %s192, [#allocation7], 64, 64, 4
        $region24: #{tpu_custom_call.1} parent=11 // pred_fallthru
          _
        // Predicated region
        $region25: #{tpu_custom_call.1} parent=11 // pred_check
          %p198 = pneg %p128
        $region26: #{tpu_custom_call.1} parent=11 // pred_check_branch
          %200 = sbr.rel (%p198) target = $region28
        $region27: #{tpu_custom_call.1} parent=11 // pred_region
          _
        $region28: #{tpu_custom_call.1} parent=11 // pred_fallthru
          _
      $region12: #{tpu_custom_call.1} parent=5 // pred_fallthru
        _
      %p201 = scmp.lt.s32.totalorder %s18, 2
      // Predicated region
      $region29: #{tpu_custom_call.1} parent=5 // pred_check
        %p202 = pneg %p201
      $region30: #{tpu_custom_call.1} parent=5 // pred_check_branch
        %204 = sbr.rel (%p202) target = $region32
      $region31: #{tpu_custom_call.1} parent=5 // pred_region
        // Predicated region
        $region33: #{tpu_custom_call.1} parent=31 // pred_check
          %p205 = pneg %p38
        $region34: #{tpu_custom_call.1} parent=31 // pred_check_branch
          %207 = sbr.rel (%p205) target = $region36
        $region35: #{tpu_custom_call.1} parent=31 // pred_region
          %s208 = sand.u32 %s28, 1
          %s209 = scalar_lea.sflag [#allocation4], %s208
          %s210 = sand.u32 %s28, 1
          %s211 = smul.addr %s210, 12
          %s212 = scalar_lea.vmem [#allocation3], %s211
          %s213 = smul.u32 3, %s18
          %s215 = ssub.s32 192, 192
          %216 = vsyncadd %s209, %s215
          %s217 = smul.addr %s213, 64
          %s218 = scalar_lea.hbm %s0, %s217
          %s219 = sshll.u32 %s212, 4
          %s220 = int_to_ptr.vmem [resolvable:$true] %s219
          %225 = dma.hbm_to_vmem [thread:$0]  %s218, 192, %s220, %s209, 64, 64, 4
        $region36: #{tpu_custom_call.1} parent=31 // pred_fallthru
          _
      $region32: #{tpu_custom_call.1} parent=5 // pred_fallthru
        _
      %p226 = scmp.le.s32.totalorder 1, %s18
      %p227 = scmp.lt.s32.totalorder %s18, 3
      %p228 = pnand %p226, %p227
      %p229 = pneg %p228
      // Predicated region
      $region37: #{tpu_custom_call.1} parent=5 // pred_check
        _
      $region38: #{tpu_custom_call.1} parent=5 // pred_check_branch
        %231 = sbr.rel (%p228) target = $region40
      $region39: #{tpu_custom_call.1} parent=5 // pred_region
        %s232 = ssub.s32 %s18, 1
        %s233 = sand.u32 %s31, 1
        %s234 = scalar_lea.sflag [#allocation4], %s233
        %s235 = sand.u32 %s31, 1
        %s236 = smul.addr %s235, 12
        %s237 = scalar_lea.vmem [#allocation3], %s236
        // Predicated region
        $region41: #{tpu_custom_call.1} parent=39 // pred_check
          %p238 = pneg %p44
        $region42: #{tpu_custom_call.1} parent=39 // pred_check_branch
          %240 = sbr.rel (%p238) target = $region44
        $region43: #{tpu_custom_call.1} parent=39 // pred_region
          %241 = dma.done %s234, 192
        $region44: #{tpu_custom_call.1} parent=39 // pred_fallthru
          _
        // Predicated region
        $region45: #{tpu_custom_call.1} parent=39 // pred_check
          %p242 = pneg %p65
        $region46: #{tpu_custom_call.1} parent=39 // pred_check_branch
          %244 = sbr.rel (%p242) target = $region48
        $region47: #{tpu_custom_call.1} parent=39 // pred_region
          %245 = dma.done [#allocation7], 3072
        $region48: #{tpu_custom_call.1} parent=39 // pred_fallthru
          _
        // Predicated region
        $region49: #{tpu_custom_call.1} parent=39 // pred_check
          %p246 = pneg %p107
        $region50: #{tpu_custom_call.1} parent=39 // pred_check_branch
          %248 = sbr.rel (%p246) target = $region52
        $region51: #{tpu_custom_call.1} parent=39 // pred_region
          %249 = dma.done [#allocation7], 1024
        $region52: #{tpu_custom_call.1} parent=39 // pred_fallthru
          _
        %s250 = sand.u32 %s31, 1
        %s251 = scalar_lea.sflag [#allocation4], %s250
        %s252 = sand.u32 %s31, 1
        %s253 = smul.addr %s252, 12
        %s254 = scalar_lea.vmem [#allocation3], %s253
        %p255 = pneg %p44
        %p256 = pneg %p41
        %p257 = pneg %p65
        %p258 = pneg %p62
        %p259 = pneg %p86
        %p260 = pneg %p83
        %p261 = pneg %p107
        %p262 = pneg %p104
        %p263 = pneg %p128
        %p264 = pneg %p125
        %p265 = pneg %p154
        %p266 = pneg %p151
        %s267 = sand.u32 %s141, 1
        %s268 = scalar_lea.sflag [#allocation5], %s267
        %s269 = sand.u32 %s141, 1
        %s270 = smul.addr %s269, 24
        %s271 = scalar_lea.vmem [#allocation9], %s270
        %s272 = smul.u32 3, %s23
        %s273 = smul.u32 3, %s23
        %v275 = vld [vmem:[%s237] sm:$0xf]
        %v276 = vld [vmem:[%s237 + $0x4] sm:$0xf]
        %v277 = vld [vmem:[%s237 + $0x8] sm:$0xf]
        %v278 = vld [vmem:[#allocation6] sm:$0xff]
        %v279 = vld [vmem:[#allocation6 + $0x8] sm:$0xf]
        %v280 = vld [vmem:[#allocation6 + $0xc] sm:$0xff]
        %v281 = vld [vmem:[#allocation6 + $0x14] sm:$0xf]
        %v282 = vld [vmem:[#allocation6 + $0x18] sm:$0xff]
        %v283 = vld [vmem:[#allocation6 + $0x20] sm:$0xf]
        %v284 = vld [vmem:[#allocation6 + $0x24] sm:$0xff]
        %v285 = vld [vmem:[#allocation6 + $0x2c] sm:$0xf]
        %v286 = vld [vmem:[#allocation6 + $0x30] sm:$0xff]
        %v287 = vld [vmem:[#allocation6 + $0x38] sm:$0xf]
        %v288 = vld [vmem:[#allocation6 + $0x3c] sm:$0xff]
        %v289 = vld [vmem:[#allocation6 + $0x44] sm:$0xf]
        %v290 = vld [vmem:[#allocation6 + $0x48] sm:$0xff]
        %v291 = vld [vmem:[#allocation6 + $0x50] sm:$0xf]
        %v292 = vld [vmem:[#allocation6 + $0x54] sm:$0xff]
        %v293 = vld [vmem:[#allocation6 + $0x5c] sm:$0xf]
        %v294 = vld [vmem:[#allocation6 + $0x60] sm:$0xff]
        %v295 = vld [vmem:[#allocation6 + $0x68] sm:$0xf]
        %v296 = vld [vmem:[#allocation6 + $0x6c] sm:$0xff]
        %v297 = vld [vmem:[#allocation6 + $0x74] sm:$0xf]
        %v298 = vld [vmem:[#allocation6 + $0x78] sm:$0xff]
        %v299 = vld [vmem:[#allocation6 + $0x80] sm:$0xf]
        %v300 = vld [vmem:[#allocation6 + $0x84] sm:$0xff]
        %v301 = vld [vmem:[#allocation6 + $0x8c] sm:$0xf]
        %v302 = vld [vmem:[#allocation6 + $0x90] sm:$0xff]
        %v303 = vld [vmem:[#allocation6 + $0x98] sm:$0xf]
        %v304 = vld [vmem:[#allocation6 + $0x9c] sm:$0xff]
        %v305 = vld [vmem:[#allocation6 + $0xa4] sm:$0xf]
        %v306 = vld [vmem:[#allocation6 + $0xa8] sm:$0xff]
        %v307 = vld [vmem:[#allocation6 + $0xb0] sm:$0xf]
        %v308 = vld [vmem:[#allocation6 + $0xb4] sm:$0xff]
        %v309 = vld [vmem:[#allocation6 + $0xbc] sm:$0xf]
        %v310 = vld [vmem:[%s2] sm:$0x7]
        %v312 = vlaneseq
        %v313 = vshrl.u32 %v312, 7
        %v314 = vsub.s32 0, %v313
        %v315 = vrot.slane %v310, %v314
        %v316 = vlaneseq
        %v317 = vshrl.u32 %v316, 7
        %v318 = vsub.s32 1, %v317
        %v319 = vrot.slane %v310, %v318
        %v320 = vlaneseq
        %v321 = vshrl.u32 %v320, 7
        %v322 = vsub.s32 2, %v321
        %v323 = vrot.slane %v310, %v322
        %v330 = vunpack.c.l.b16 %v275
        %v331 = vunpack.c.l.b16 %v276
        %v332 = vunpack.c.l.b16 %v277
        %v333 = vpack.c.b16 %v331, %v330
        %v334 = vpack.c.b16 %v332, %v332
        %v369 = vunpack.c.l.b16 %v278
        %v370 = vunpack.c.h.b16 %v278
        %v371 = vunpack.c.l.b16 %v279
        %v372 = vunpack.c.l.b16 %v280
        %v373 = vunpack.c.h.b16 %v280
        %v374 = vunpack.c.l.b16 %v281
        %v375 = vunpack.c.l.b16 %v282
        %v376 = vunpack.c.h.b16 %v282
        %v377 = vunpack.c.l.b16 %v283
        %v378 = vunpack.c.l.b16 %v284
        %v379 = vunpack.c.h.b16 %v284
        %v380 = vunpack.c.l.b16 %v285
        %v381 = vunpack.c.l.b16 %v286
        %v382 = vunpack.c.h.b16 %v286
        %v383 = vunpack.c.l.b16 %v287
        %v384 = vunpack.c.l.b16 %v288
        %v385 = vunpack.c.h.b16 %v288
        %v386 = vunpack.c.l.b16 %v289
        %v387 = vunpack.c.l.b16 %v290
        %v388 = vunpack.c.h.b16 %v290
        %v389 = vunpack.c.l.b16 %v291
        %v390 = vunpack.c.l.b16 %v292
        %v391 = vunpack.c.h.b16 %v292
        %v392 = vunpack.c.l.b16 %v293
        %v393 = vunpack.c.l.b16 %v294
        %v394 = vunpack.c.h.b16 %v294
        %v395 = vunpack.c.l.b16 %v295
        %v396 = vunpack.c.l.b16 %v296
        %v397 = vunpack.c.h.b16 %v296
        %v398 = vunpack.c.l.b16 %v297
        %v399 = vunpack.c.l.b16 %v298
        %v400 = vunpack.c.h.b16 %v298
        %v401 = vunpack.c.l.b16 %v299
        %v402 = vunpack.c.l.b16 %v300
        %v403 = vunpack.c.h.b16 %v300
        %v404 = vunpack.c.l.b16 %v301
        %v405 = vunpack.c.l.b16 %v302
        %v406 = vunpack.c.h.b16 %v302
        %v407 = vunpack.c.l.b16 %v303
        %v408 = vunpack.c.l.b16 %v304
        %v409 = vunpack.c.h.b16 %v304
        %v410 = vunpack.c.l.b16 %v305
        %v411 = vunpack.c.l.b16 %v306
        %v412 = vunpack.c.h.b16 %v306
        %v413 = vunpack.c.l.b16 %v307
        %v414 = vunpack.c.l.b16 %v308
        %v415 = vunpack.c.h.b16 %v308
        %v416 = vunpack.c.l.b16 %v309
        %v417 = vpack.c.b16 %v372, %v369
        %v418 = vpack.c.b16 %v373, %v370
        %v419 = vpack.c.b16 %v374, %v371
        %v420 = vpack.c.b16 %v378, %v375
        %v421 = vpack.c.b16 %v379, %v376
        %v422 = vpack.c.b16 %v380, %v377
        %v423 = vpack.c.b16 %v384, %v381
        %v424 = vpack.c.b16 %v385, %v382
        %v425 = vpack.c.b16 %v386, %v383
        %v426 = vpack.c.b16 %v390, %v387
        %v427 = vpack.c.b16 %v391, %v388
        %v428 = vpack.c.b16 %v392, %v389
        %v429 = vpack.c.b16 %v396, %v393
        %v430 = vpack.c.b16 %v397, %v394
        %v431 = vpack.c.b16 %v398, %v395
        %v432 = vpack.c.b16 %v402, %v399
        %v433 = vpack.c.b16 %v403, %v400
        %v434 = vpack.c.b16 %v404, %v401
        %v435 = vpack.c.b16 %v408, %v405
        %v436 = vpack.c.b16 %v409, %v406
        %v437 = vpack.c.b16 %v410, %v407
        %v438 = vpack.c.b16 %v414, %v411
        %v439 = vpack.c.b16 %v415, %v412
        %v440 = vpack.c.b16 %v416, %v413
        %465 = vmatprep.subr.bf16.mxu0 %v439
        %466 = vmatpush1.bf16.msra.mxu0 %v438
        %467 = vmatprep.subr.bf16.mxu0 %v436
        %468 = vmatpush1.bf16.msra.mxu0 %v435
        %469 = vmatprep.subr.bf16.mxu0 %v433
        %470 = vmatpush1.bf16.msra.mxu0 %v432
        %471 = vmatprep.subr.bf16.mxu0 %v430
        %472 = vmatpush1.bf16.msra.mxu0 %v429
        %473 = vmatprep.subr.bf16.mxu0 %v427
        %474 = vmatpush1.bf16.msra.mxu0 %v426
        %475 = vmatprep.subr.bf16.mxu0 %v424
        %476 = vmatpush1.bf16.msra.mxu0 %v423
        %477 = vmatprep.subr.bf16.mxu0 %v421
        %478 = vmatpush1.bf16.msra.mxu0 %v420
        %479 = vmatprep.subr.bf16.mxu0 %v418
        %480 = vmatpush1.bf16.msra.mxu0 %v417
        %481 = vmatprep.subr.bf16.mxu0 0
        %482 = vmatpush2.bf16.msra.mxu0 0
        %483 = vmatprep.subr.bf16.mxu0 0
        %484 = vmatpush2.bf16.msra.mxu0 0
        %485 = vmatprep.subr.bf16.mxu0 0
        %486 = vmatpush2.bf16.msra.mxu0 0
        %487 = vmatprep.subr.bf16.mxu0 0
        %488 = vmatpush2.bf16.msra.mxu0 0
        %489 = vmatprep.subr.bf16.mxu0 0
        %490 = vmatpush2.bf16.msra.mxu0 0
        %491 = vmatprep.subr.bf16.mxu0 0
        %492 = vmatpush2.bf16.msra.mxu0 0
        %493 = vmatprep.subr.bf16.mxu0 0
        %494 = vmatpush2.bf16.msra.mxu0 0
        %495 = vmatprep.subr.bf16.mxu0 0
        %496 = vmatpush2.bf16.msra.mxu0 0
        %497 = vmatprep.mubr.bf16.mxu0 0
        %498 = vmatmul.mubr.bf16.gmra.mxu0 %v333
        %v499 = vpop.f32.mrf.mxu0
        %v500 = vadd.f32 %v315, %v499
        %v501 = vpop.f32.mrf.mxu0
        %v502 = vadd.f32 %v319, %v501
        %v503 = vpop.f32.mrf.mxu0
        %v504 = vadd.f32 %v315, %v503
        %v505 = vpop.f32.mrf.mxu0
        %v506 = vadd.f32 %v319, %v505
        %507 = vmatprep.mubr.bf16.mxu0 0
        %508 = vmatmul.mubr.bf16.gmra.mxu0 %v334
        %v509 = vpop.f32.mrf.mxu0
        %v510 = vadd.f32 %v315, %v509
        %v511 = vpop.f32.mrf.mxu0
        %v512 = vadd.f32 %v319, %v511
        %v513 = vpop.f32.mrf.mxu0
        %v514 = vpop.f32.mrf.mxu0
        %515 = vdwg.mxu0
        %516 = vmatprep.subr.bf16.mxu0 0
        %517 = vmatpush1.bf16.msra.mxu0 %v440
        %518 = vmatprep.subr.bf16.mxu0 0
        %519 = vmatpush1.bf16.msra.mxu0 %v437
        %520 = vmatprep.subr.bf16.mxu0 0
        %521 = vmatpush1.bf16.msra.mxu0 %v434
        %522 = vmatprep.subr.bf16.mxu0 0
        %523 = vmatpush1.bf16.msra.mxu0 %v431
        %524 = vmatprep.subr.bf16.mxu0 0
        %525 = vmatpush1.bf16.msra.mxu0 %v428
        %526 = vmatprep.subr.bf16.mxu0 0
        %527 = vmatpush1.bf16.msra.mxu0 %v425
        %528 = vmatprep.subr.bf16.mxu0 0
        %529 = vmatpush1.bf16.msra.mxu0 %v422
        %530 = vmatprep.subr.bf16.mxu0 0
        %531 = vmatpush1.bf16.msra.mxu0 %v419
        %532 = vmatprep.subr.bf16.mxu0 0
        %533 = vmatpush2.bf16.msra.mxu0 0
        %534 = vmatprep.subr.bf16.mxu0 0
        %535 = vmatpush2.bf16.msra.mxu0 0
        %536 = vmatprep.subr.bf16.mxu0 0
        %537 = vmatpush2.bf16.msra.mxu0 0
        %538 = vmatprep.subr.bf16.mxu0 0
        %539 = vmatpush2.bf16.msra.mxu0 0
        %540 = vmatprep.subr.bf16.mxu0 0
        %541 = vmatpush2.bf16.msra.mxu0 0
        %542 = vmatprep.subr.bf16.mxu0 0
        %543 = vmatpush2.bf16.msra.mxu0 0
        %544 = vmatprep.subr.bf16.mxu0 0
        %545 = vmatpush2.bf16.msra.mxu0 0
        %546 = vmatprep.subr.bf16.mxu0 0
        %547 = vmatpush2.bf16.msra.mxu0 0
        %548 = vmatprep.mubr.bf16.mxu0 0
        %549 = vmatmul.mubr.bf16.gmra.mxu0 %v333
        %v550 = vpop.f32.mrf.mxu0
        %v551 = vadd.f32 %v323, %v550
        %v552 = vpop.f32.mrf.mxu0
        %v553 = vpop.f32.mrf.mxu0
        %v554 = vadd.f32 %v323, %v553
        %v555 = vpop.f32.mrf.mxu0
        %556 = vmatprep.mubr.bf16.mxu0 0
        %557 = vmatmul.mubr.bf16.gmra.mxu0 %v334
        %v558 = vpop.f32.mrf.mxu0
        %v559 = vadd.f32 %v323, %v558
        %v560 = vpop.f32.mrf.mxu0
        %v561 = vpop.f32.mrf.mxu0
        %v562 = vpop.f32.mrf.mxu0
        %563 = vdwg.mxu0
        %v564 = vpack.c.bf16 %v500, %v500
        %v565 = vpack.c.bf16 %v504, %v504
        %v566 = vpack.c.bf16 %v510, %v510
        %v567 = vpack.c.bf16 %v502, %v502
        %v568 = vpack.c.bf16 %v506, %v506
        %v569 = vpack.c.bf16 %v512, %v512
        %v570 = vpack.c.bf16 %v551, %v551
        %v571 = vpack.c.bf16 %v554, %v554
        %v572 = vpack.c.bf16 %v559, %v559
        %vm573 = vcmask 261120
        %v575 = vsel %vm573, %v564, 0
        %v578 = vsel %vm573, %v567, 0
        %580 = vmatprep.subr.bf16.mxu0 0
        %581 = vmatpush1.bf16.xpose.msra.mxu0 0
        %582 = vmatprep.subr.bf16.mxu0 0
        %583 = vmatpush1.bf16.xpose.msra.mxu0 0
        %584 = vmatprep.subr.bf16.mxu0 0
        %585 = vmatpush1.bf16.xpose.msra.mxu0 0
        %586 = vmatprep.subr.bf16.mxu0 0
        %587 = vmatpush1.bf16.xpose.msra.mxu0 0
        %588 = vmatprep.subr.bf16.mxu0 0
        %589 = vmatpush1.bf16.xpose.msra.mxu0 0
        %590 = vmatprep.subr.bf16.mxu0 0
        %591 = vmatpush1.bf16.xpose.msra.mxu0 0
        %592 = vmatprep.subr.bf16.mxu0 0
        %593 = vmatpush1.bf16.xpose.msra.mxu0 0
        %594 = vmatprep.subr.bf16.mxu0 0
        %595 = vmatpush1.bf16.xpose.msra.mxu0 %v578
        %596 = vmatprep.subr.bf16.mxu0 0
        %597 = vmatpush2.bf16.xpose.msra.mxu0 0
        %598 = vmatprep.subr.bf16.mxu0 0
        %599 = vmatpush2.bf16.xpose.msra.mxu0 0
        %600 = vmatprep.subr.bf16.mxu0 0
        %601 = vmatpush2.bf16.xpose.msra.mxu0 0
        %602 = vmatprep.subr.bf16.mxu0 0
        %603 = vmatpush2.bf16.xpose.msra.mxu0 0
        %604 = vmatprep.subr.bf16.mxu0 0
        %605 = vmatpush2.bf16.xpose.msra.mxu0 0
        %606 = vmatprep.subr.bf16.mxu0 0
        %607 = vmatpush2.bf16.xpose.msra.mxu0 0
        %608 = vmatprep.subr.bf16.mxu0 0
        %609 = vmatpush2.bf16.xpose.msra.mxu0 0
        %610 = vmatprep.subr.bf16.mxu0 0
        %611 = vmatpush2.bf16.xpose.msra.mxu0 0
        %612 = vmatprep.mubr.bf16.mxu0 0
        %613 = vmatmul.mubr.bf16.gmra.mxu0 %v575
        %v614 = vpop.f32.mrf.mxu0
        %v615 = vadd.f32 0.0, %v614
        %v616 = vpop.f32.mrf.mxu0
        %v617 = vpop.f32.mrf.mxu0
        %v618 = vpop.f32.mrf.mxu0
        %619 = vdwg.mxu0
        %v621 = vsel %vm573, %v565, 0
        %v624 = vsel %vm573, %v568, 0
        %626 = vmatprep.subr.bf16.mxu0 0
        %627 = vmatpush1.bf16.xpose.msra.mxu0 0
        %628 = vmatprep.subr.bf16.mxu0 0
        %629 = vmatpush1.bf16.xpose.msra.mxu0 0
        %630 = vmatprep.subr.bf16.mxu0 0
        %631 = vmatpush1.bf16.xpose.msra.mxu0 0
        %632 = vmatprep.subr.bf16.mxu0 0
        %633 = vmatpush1.bf16.xpose.msra.mxu0 0
        %634 = vmatprep.subr.bf16.mxu0 0
        %635 = vmatpush1.bf16.xpose.msra.mxu0 0
        %636 = vmatprep.subr.bf16.mxu0 0
        %637 = vmatpush1.bf16.xpose.msra.mxu0 0
        %638 = vmatprep.subr.bf16.mxu0 0
        %639 = vmatpush1.bf16.xpose.msra.mxu0 0
        %640 = vmatprep.subr.bf16.mxu0 0
        %641 = vmatpush1.bf16.xpose.msra.mxu0 %v624
        %642 = vmatprep.subr.bf16.mxu0 0
        %643 = vmatpush2.bf16.xpose.msra.mxu0 0
        %644 = vmatprep.subr.bf16.mxu0 0
        %645 = vmatpush2.bf16.xpose.msra.mxu0 0
        %646 = vmatprep.subr.bf16.mxu0 0
        %647 = vmatpush2.bf16.xpose.msra.mxu0 0
        %648 = vmatprep.subr.bf16.mxu0 0
        %649 = vmatpush2.bf16.xpose.msra.mxu0 0
        %650 = vmatprep.subr.bf16.mxu0 0
        %651 = vmatpush2.bf16.xpose.msra.mxu0 0
        %652 = vmatprep.subr.bf16.mxu0 0
        %653 = vmatpush2.bf16.xpose.msra.mxu0 0
        %654 = vmatprep.subr.bf16.mxu0 0
        %655 = vmatpush2.bf16.xpose.msra.mxu0 0
        %656 = vmatprep.subr.bf16.mxu0 0
        %657 = vmatpush2.bf16.xpose.msra.mxu0 0
        %658 = vmatprep.mubr.bf16.mxu0 0
        %659 = vmatmul.mubr.bf16.gmra.mxu0 %v621
        %v660 = vpop.f32.mrf.mxu0
        %v661 = vadd.f32 0.0, %v660
        %v662 = vpop.f32.mrf.mxu0
        %v663 = vpop.f32.mrf.mxu0
        %v664 = vpop.f32.mrf.mxu0
        %665 = vdwg.mxu0
        %v667 = vsel %vm573, %v566, 0
        %v670 = vsel %vm573, %v569, 0
        %672 = vmatprep.subr.bf16.mxu0 0
        %673 = vmatpush1.bf16.xpose.msra.mxu0 0
        %674 = vmatprep.subr.bf16.mxu0 0
        %675 = vmatpush1.bf16.xpose.msra.mxu0 0
        %676 = vmatprep.subr.bf16.mxu0 0
        %677 = vmatpush1.bf16.xpose.msra.mxu0 0
        %678 = vmatprep.subr.bf16.mxu0 0
        %679 = vmatpush1.bf16.xpose.msra.mxu0 0
        %680 = vmatprep.subr.bf16.mxu0 0
        %681 = vmatpush1.bf16.xpose.msra.mxu0 0
        %682 = vmatprep.subr.bf16.mxu0 0
        %683 = vmatpush1.bf16.xpose.msra.mxu0 0
        %684 = vmatprep.subr.bf16.mxu0 0
        %685 = vmatpush1.bf16.xpose.msra.mxu0 0
        %686 = vmatprep.subr.bf16.mxu0 0
        %687 = vmatpush1.bf16.xpose.msra.mxu0 %v670
        %688 = vmatprep.subr.bf16.mxu0 0
        %689 = vmatpush2.bf16.xpose.msra.mxu0 0
        %690 = vmatprep.subr.bf16.mxu0 0
        %691 = vmatpush2.bf16.xpose.msra.mxu0 0
        %692 = vmatprep.subr.bf16.mxu0 0
        %693 = vmatpush2.bf16.xpose.msra.mxu0 0
        %694 = vmatprep.subr.bf16.mxu0 0
        %695 = vmatpush2.bf16.xpose.msra.mxu0 0
        %696 = vmatprep.subr.bf16.mxu0 0
        %697 = vmatpush2.bf16.xpose.msra.mxu0 0
        %698 = vmatprep.subr.bf16.mxu0 0
        %699 = vmatpush2.bf16.xpose.msra.mxu0 0
        %700 = vmatprep.subr.bf16.mxu0 0
        %701 = vmatpush2.bf16.xpose.msra.mxu0 0
        %702 = vmatprep.subr.bf16.mxu0 0
        %703 = vmatpush2.bf16.xpose.msra.mxu0 0
        %704 = vmatprep.mubr.bf16.mxu0 0
        %705 = vmatmul.mubr.bf16.gmra.mxu0 %v667
        %v706 = vpop.f32.mrf.mxu0
        %v707 = vadd.f32 0.0, %v706
        %v708 = vpop.f32.mrf.mxu0
        %v709 = vpop.f32.mrf.mxu0
        %v710 = vpop.f32.mrf.mxu0
        %711 = vdwg.mxu0
        %vm712 = vcmask 64512
        %v713 = vsel %vm712, %v615, -inf
        %714 = vmax.xlane.f32.xlu0 %v713
        %v715 = vpop.xlane.xlu0 %714
        %v716 = vsel %vm712, %v661, -inf
        %717 = vmax.xlane.f32.xlu0 %v716
        %v718 = vpop.xlane.xlu0 %717
        %v719 = vsel %vm712, %v707, -inf
        %720 = vmax.xlane.f32.xlu0 %v719
        %v721 = vpop.xlane.xlu0 %720
        %v722 = vsub.f32 %v615, %v715
        %v723 = vsub.f32 %v661, %v718
        %v724 = vsub.f32 %v707, %v721
        %v725 = vmul.f32 %v722, 1.442695
        %v726 = vpow.pop %v725
        %v727 = vmul.f32 %v723, 1.442695
        %v728 = vpow.pop %v727
        %v729 = vmul.f32 %v724, 1.442695
        %v730 = vpow.pop %v729
        %v731 = vsel %vm712, %v726, 0.0
        %732 = vadd.xlane.f32.xlu0 %v731
        %v733 = vpop.xlane.xlu0 %732
        %v734 = vsel %vm712, %v728, 0.0
        %735 = vadd.xlane.f32.xlu0 %v734
        %v736 = vpop.xlane.xlu0 %735
        %v737 = vsel %vm712, %v730, 0.0
        %738 = vadd.xlane.f32.xlu0 %v737
        %v739 = vpop.xlane.xlu0 %738
        %v740 = vrcp.pop %v733
        %v741 = vrcp.pop %v736
        %v742 = vrcp.pop %v739
        %v743 = vmul.f32 %v726, %v740
        %v744 = vmul.f32 %v728, %v741
        %v745 = vmul.f32 %v730, %v742
        %v746 = vpack.c.bf16 %v743, %v743
        %v747 = vpack.c.bf16 %v744, %v744
        %v748 = vpack.c.bf16 %v745, %v745
        %v750 = vsel %vm712, %v746, 0
        %vm752 = vcmask 1043456
        %v754 = vsel %vm752, %v570, 0
        %756 = vmatprep.subr.bf16.mxu0 0
        %757 = vmatpush1.bf16.msra.mxu0 0
        %758 = vmatprep.subr.bf16.mxu0 0
        %759 = vmatpush1.bf16.msra.mxu0 0
        %760 = vmatprep.subr.bf16.mxu0 0
        %761 = vmatpush1.bf16.msra.mxu0 0
        %762 = vmatprep.subr.bf16.mxu0 0
        %763 = vmatpush1.bf16.msra.mxu0 0
        %764 = vmatprep.subr.bf16.mxu0 0
        %765 = vmatpush1.bf16.msra.mxu0 0
        %766 = vmatprep.subr.bf16.mxu0 0
        %767 = vmatpush1.bf16.msra.mxu0 0
        %768 = vmatprep.subr.bf16.mxu0 0
        %769 = vmatpush1.bf16.msra.mxu0 0
        %770 = vmatprep.subr.bf16.mxu0 0
        %771 = vmatpush1.bf16.msra.mxu0 %v754
        %772 = vmatprep.subr.bf16.mxu0 0
        %773 = vmatpush2.bf16.msra.mxu0 0
        %774 = vmatprep.subr.bf16.mxu0 0
        %775 = vmatpush2.bf16.msra.mxu0 0
        %776 = vmatprep.subr.bf16.mxu0 0
        %777 = vmatpush2.bf16.msra.mxu0 0
        %778 = vmatprep.subr.bf16.mxu0 0
        %779 = vmatpush2.bf16.msra.mxu0 0
        %780 = vmatprep.subr.bf16.mxu0 0
        %781 = vmatpush2.bf16.msra.mxu0 0
        %782 = vmatprep.subr.bf16.mxu0 0
        %783 = vmatpush2.bf16.msra.mxu0 0
        %784 = vmatprep.subr.bf16.mxu0 0
        %785 = vmatpush2.bf16.msra.mxu0 0
        %786 = vmatprep.subr.bf16.mxu0 0
        %787 = vmatpush2.bf16.msra.mxu0 0
        %788 = vmatprep.mubr.bf16.mxu0 0
        %789 = vmatmul.mubr.bf16.gmra.mxu0 %v750
        %v790 = vpop.f32.mrf.mxu0
        %v791 = vadd.f32 0.0, %v790
        %v792 = vpop.f32.mrf.mxu0
        %v793 = vpop.f32.mrf.mxu0
        %v794 = vpop.f32.mrf.mxu0
        %795 = vdwg.mxu0
        %v797 = vsel %vm712, %v747, 0
        %v800 = vsel %vm752, %v571, 0
        %802 = vmatprep.subr.bf16.mxu0 0
        %803 = vmatpush1.bf16.msra.mxu0 0
        %804 = vmatprep.subr.bf16.mxu0 0
        %805 = vmatpush1.bf16.msra.mxu0 0
        %806 = vmatprep.subr.bf16.mxu0 0
        %807 = vmatpush1.bf16.msra.mxu0 0
        %808 = vmatprep.subr.bf16.mxu0 0
        %809 = vmatpush1.bf16.msra.mxu0 0
        %810 = vmatprep.subr.bf16.mxu0 0
        %811 = vmatpush1.bf16.msra.mxu0 0
        %812 = vmatprep.subr.bf16.mxu0 0
        %813 = vmatpush1.bf16.msra.mxu0 0
        %814 = vmatprep.subr.bf16.mxu0 0
        %815 = vmatpush1.bf16.msra.mxu0 0
        %816 = vmatprep.subr.bf16.mxu0 0
        %817 = vmatpush1.bf16.msra.mxu0 %v800
        %818 = vmatprep.subr.bf16.mxu0 0
        %819 = vmatpush2.bf16.msra.mxu0 0
        %820 = vmatprep.subr.bf16.mxu0 0
        %821 = vmatpush2.bf16.msra.mxu0 0
        %822 = vmatprep.subr.bf16.mxu0 0
        %823 = vmatpush2.bf16.msra.mxu0 0
        %824 = vmatprep.subr.bf16.mxu0 0
        %825 = vmatpush2.bf16.msra.mxu0 0
        %826 = vmatprep.subr.bf16.mxu0 0
        %827 = vmatpush2.bf16.msra.mxu0 0
        %828 = vmatprep.subr.bf16.mxu0 0
        %829 = vmatpush2.bf16.msra.mxu0 0
        %830 = vmatprep.subr.bf16.mxu0 0
        %831 = vmatpush2.bf16.msra.mxu0 0
        %832 = vmatprep.subr.bf16.mxu0 0
        %833 = vmatpush2.bf16.msra.mxu0 0
        %834 = vmatprep.mubr.bf16.mxu0 0
        %835 = vmatmul.mubr.bf16.gmra.mxu0 %v797
        %v836 = vpop.f32.mrf.mxu0
        %v837 = vadd.f32 0.0, %v836
        %v838 = vpop.f32.mrf.mxu0
        %v839 = vpop.f32.mrf.mxu0
        %v840 = vpop.f32.mrf.mxu0
        %841 = vdwg.mxu0
        %v843 = vsel %vm712, %v748, 0
        %v846 = vsel %vm752, %v572, 0
        %848 = vmatprep.subr.bf16.mxu0 0
        %849 = vmatpush1.bf16.msra.mxu0 0
        %850 = vmatprep.subr.bf16.mxu0 0
        %851 = vmatpush1.bf16.msra.mxu0 0
        %852 = vmatprep.subr.bf16.mxu0 0
        %853 = vmatpush1.bf16.msra.mxu0 0
        %854 = vmatprep.subr.bf16.mxu0 0
        %855 = vmatpush1.bf16.msra.mxu0 0
        %856 = vmatprep.subr.bf16.mxu0 0
        %857 = vmatpush1.bf16.msra.mxu0 0
        %858 = vmatprep.subr.bf16.mxu0 0
        %859 = vmatpush1.bf16.msra.mxu0 0
        %860 = vmatprep.subr.bf16.mxu0 0
        %861 = vmatpush1.bf16.msra.mxu0 0
        %862 = vmatprep.subr.bf16.mxu0 0
        %863 = vmatpush1.bf16.msra.mxu0 %v846
        %864 = vmatprep.subr.bf16.mxu0 0
        %865 = vmatpush2.bf16.msra.mxu0 0
        %866 = vmatprep.subr.bf16.mxu0 0
        %867 = vmatpush2.bf16.msra.mxu0 0
        %868 = vmatprep.subr.bf16.mxu0 0
        %869 = vmatpush2.bf16.msra.mxu0 0
        %870 = vmatprep.subr.bf16.mxu0 0
        %871 = vmatpush2.bf16.msra.mxu0 0
        %872 = vmatprep.subr.bf16.mxu0 0
        %873 = vmatpush2.bf16.msra.mxu0 0
        %874 = vmatprep.subr.bf16.mxu0 0
        %875 = vmatpush2.bf16.msra.mxu0 0
        %876 = vmatprep.subr.bf16.mxu0 0
        %877 = vmatpush2.bf16.msra.mxu0 0
        %878 = vmatprep.subr.bf16.mxu0 0
        %879 = vmatpush2.bf16.msra.mxu0 0
        %880 = vmatprep.mubr.bf16.mxu0 0
        %881 = vmatmul.mubr.bf16.gmra.mxu0 %v843
        %v882 = vpop.f32.mrf.mxu0
        %v883 = vadd.f32 0.0, %v882
        %v884 = vpop.f32.mrf.mxu0
        %v885 = vpop.f32.mrf.mxu0
        %v886 = vpop.f32.mrf.mxu0
        %887 = vdwg.mxu0
        %v888 = vpack.c.bf16 %v837, %v791
        %v889 = vpack.c.bf16 %v883, %v883
        %v892 = vunpack.c.l.b16 %v888
        %v893 = vunpack.c.h.b16 %v888
        %v894 = vunpack.c.l.b16 %v889
        %v895 = vpack.c.b16 %v892, %v892
        %v896 = vpack.c.b16 %v893, %v893
        %v897 = vpack.c.b16 %v894, %v894
        %vm901 = vcmask 257024
        %902 = vst.msk [vmem:[#allocation2] sm:$0xf] %vm901, %v895
        %903 = vst.msk [vmem:[#allocation2 + $0x4] sm:$0xf] %vm901, %v896
        %904 = vst.msk [vmem:[#allocation2 + $0x8] sm:$0xf] %vm901, %v897
        %906 = vrot.lane.b32.xlu0 %v564, 96
        %v907 = vpop.permute.xlu0 %906
        %909 = vrot.lane.b32.xlu0 %v567, 96
        %v910 = vpop.permute.xlu0 %909
        %v912 = vsel %vm573, %v907, 0
        %v915 = vsel %vm573, %v910, 0
        %917 = vmatprep.subr.bf16.mxu0 0
        %918 = vmatpush1.bf16.xpose.msra.mxu0 0
        %919 = vmatprep.subr.bf16.mxu0 0
        %920 = vmatpush1.bf16.xpose.msra.mxu0 0
        %921 = vmatprep.subr.bf16.mxu0 0
        %922 = vmatpush1.bf16.xpose.msra.mxu0 0
        %923 = vmatprep.subr.bf16.mxu0 0
        %924 = vmatpush1.bf16.xpose.msra.mxu0 0
        %925 = vmatprep.subr.bf16.mxu0 0
        %926 = vmatpush1.bf16.xpose.msra.mxu0 0
        %927 = vmatprep.subr.bf16.mxu0 0
        %928 = vmatpush1.bf16.xpose.msra.mxu0 0
        %929 = vmatprep.subr.bf16.mxu0 0
        %930 = vmatpush1.bf16.xpose.msra.mxu0 0
        %931 = vmatprep.subr.bf16.mxu0 0
        %932 = vmatpush1.bf16.xpose.msra.mxu0 %v915
        %933 = vmatprep.subr.bf16.mxu0 0
        %934 = vmatpush2.bf16.xpose.msra.mxu0 0
        %935 = vmatprep.subr.bf16.mxu0 0
        %936 = vmatpush2.bf16.xpose.msra.mxu0 0
        %937 = vmatprep.subr.bf16.mxu0 0
        %938 = vmatpush2.bf16.xpose.msra.mxu0 0
        %939 = vmatprep.subr.bf16.mxu0 0
        %940 = vmatpush2.bf16.xpose.msra.mxu0 0
        %941 = vmatprep.subr.bf16.mxu0 0
        %942 = vmatpush2.bf16.xpose.msra.mxu0 0
        %943 = vmatprep.subr.bf16.mxu0 0
        %944 = vmatpush2.bf16.xpose.msra.mxu0 0
        %945 = vmatprep.subr.bf16.mxu0 0
        %946 = vmatpush2.bf16.xpose.msra.mxu0 0
        %947 = vmatprep.subr.bf16.mxu0 0
        %948 = vmatpush2.bf16.xpose.msra.mxu0 0
        %949 = vmatprep.mubr.bf16.mxu0 0
        %950 = vmatmul.mubr.bf16.gmra.mxu0 %v912
        %v951 = vpop.f32.mrf.mxu0
        %v952 = vadd.f32 0.0, %v951
        %v953 = vpop.f32.mrf.mxu0
        %v954 = vpop.f32.mrf.mxu0
        %v955 = vpop.f32.mrf.mxu0
        %956 = vdwg.mxu0
        %958 = vrot.lane.b32.xlu0 %v565, 96
        %v959 = vpop.permute.xlu0 %958
        %961 = vrot.lane.b32.xlu0 %v568, 96
        %v962 = vpop.permute.xlu0 %961
        %v964 = vsel %vm573, %v959, 0
        %v967 = vsel %vm573, %v962, 0
        %969 = vmatprep.subr.bf16.mxu0 0
        %970 = vmatpush1.bf16.xpose.msra.mxu0 0
        %971 = vmatprep.subr.bf16.mxu0 0
        %972 = vmatpush1.bf16.xpose.msra.mxu0 0
        %973 = vmatprep.subr.bf16.mxu0 0
        %974 = vmatpush1.bf16.xpose.msra.mxu0 0
        %975 = vmatprep.subr.bf16.mxu0 0
        %976 = vmatpush1.bf16.xpose.msra.mxu0 0
        %977 = vmatprep.subr.bf16.mxu0 0
        %978 = vmatpush1.bf16.xpose.msra.mxu0 0
        %979 = vmatprep.subr.bf16.mxu0 0
        %980 = vmatpush1.bf16.xpose.msra.mxu0 0
        %981 = vmatprep.subr.bf16.mxu0 0
        %982 = vmatpush1.bf16.xpose.msra.mxu0 0
        %983 = vmatprep.subr.bf16.mxu0 0
        %984 = vmatpush1.bf16.xpose.msra.mxu0 %v967
        %985 = vmatprep.subr.bf16.mxu0 0
        %986 = vmatpush2.bf16.xpose.msra.mxu0 0
        %987 = vmatprep.subr.bf16.mxu0 0
        %988 = vmatpush2.bf16.xpose.msra.mxu0 0
        %989 = vmatprep.subr.bf16.mxu0 0
        %990 = vmatpush2.bf16.xpose.msra.mxu0 0
        %991 = vmatprep.subr.bf16.mxu0 0
        %992 = vmatpush2.bf16.xpose.msra.mxu0 0
        %993 = vmatprep.subr.bf16.mxu0 0
        %994 = vmatpush2.bf16.xpose.msra.mxu0 0
        %995 = vmatprep.subr.bf16.mxu0 0
        %996 = vmatpush2.bf16.xpose.msra.mxu0 0
        %997 = vmatprep.subr.bf16.mxu0 0
        %998 = vmatpush2.bf16.xpose.msra.mxu0 0
        %999 = vmatprep.subr.bf16.mxu0 0
        %1000 = vmatpush2.bf16.xpose.msra.mxu0 0
        %1001 = vmatprep.mubr.bf16.mxu0 0
        %1002 = vmatmul.mubr.bf16.gmra.mxu0 %v964
        %v1003 = vpop.f32.mrf.mxu0
        %v1004 = vadd.f32 0.0, %v1003
        %v1005 = vpop.f32.mrf.mxu0
        %v1006 = vpop.f32.mrf.mxu0
        %v1007 = vpop.f32.mrf.mxu0
        %1008 = vdwg.mxu0
        %1010 = vrot.lane.b32.xlu0 %v566, 96
        %v1011 = vpop.permute.xlu0 %1010
        %1013 = vrot.lane.b32.xlu0 %v569, 96
        %v1014 = vpop.permute.xlu0 %1013
        %v1016 = vsel %vm573, %v1011, 0
        %v1019 = vsel %vm573, %v1014, 0
        %1021 = vmatprep.subr.bf16.mxu0 0
        %1022 = vmatpush1.bf16.xpose.msra.mxu0 0
        %1023 = vmatprep.subr.bf16.mxu0 0
        %1024 = vmatpush1.bf16.xpose.msra.mxu0 0
        %1025 = vmatprep.subr.bf16.mxu0 0
        %1026 = vmatpush1.bf16.xpose.msra.mxu0 0
        %1027 = vmatprep.subr.bf16.mxu0 0
        %1028 = vmatpush1.bf16.xpose.msra.mxu0 0
        %1029 = vmatprep.subr.bf16.mxu0 0
        %1030 = vmatpush1.bf16.xpose.msra.mxu0 0
        %1031 = vmatprep.subr.bf16.mxu0 0
        %1032 = vmatpush1.bf16.xpose.msra.mxu0 0
        %1033 = vmatprep.subr.bf16.mxu0 0
        %1034 = vmatpush1.bf16.xpose.msra.mxu0 0
        %1035 = vmatprep.subr.bf16.mxu0 0
        %1036 = vmatpush1.bf16.xpose.msra.mxu0 %v1019
        %1037 = vmatprep.subr.bf16.mxu0 0
        %1038 = vmatpush2.bf16.xpose.msra.mxu0 0
        %1039 = vmatprep.subr.bf16.mxu0 0
        %1040 = vmatpush2.bf16.xpose.msra.mxu0 0
        %1041 = vmatprep.subr.bf16.mxu0 0
        %1042 = vmatpush2.bf16.xpose.msra.mxu0 0
        %1043 = vmatprep.subr.bf16.mxu0 0
        %1044 = vmatpush2.bf16.xpose.msra.mxu0 0
        %1045 = vmatprep.subr.bf16.mxu0 0
        %1046 = vmatpush2.bf16.xpose.msra.mxu0 0
        %1047 = vmatprep.subr.bf16.mxu0 0
        %1048 = vmatpush2.bf16.xpose.msra.mxu0 0
        %1049 = vmatprep.subr.bf16.mxu0 0
        %1050 = vmatpush2.bf16.xpose.msra.mxu0 0
        %1051 = vmatprep.subr.bf16.mxu0 0
        %1052 = vmatpush2.bf16.xpose.msra.mxu0 0
        %1053 = vmatprep.mubr.bf16.mxu0 0
        %1054 = vmatmul.mubr.bf16.gmra.mxu0 %v1016
        %v1055 = vpop.f32.mrf.mxu0
        %v1056 = vadd.f32 0.0, %v1055
        %v1057 = vpop.f32.mrf.mxu0
        %v1058 = vpop.f32.mrf.mxu0
        %v1059 = vpop.f32.mrf.mxu0
        %1060 = vdwg.mxu0
        %v1061 = vsel %vm712, %v952, -inf
        %1062 = vmax.xlane.f32.xlu0 %v1061
        %v1063 = vpop.xlane.xlu0 %1062
        %v1064 = vsel %vm712, %v1004, -inf
        %1065 = vmax.xlane.f32.xlu0 %v1064
        %v1066 = vpop.xlane.xlu0 %1065
        %v1067 = vsel %vm712, %v1056, -inf
        %1068 = vmax.xlane.f32.xlu0 %v1067
        %v1069 = vpop.xlane.xlu0 %1068
        %v1070 = vsub.f32 %v952, %v1063
        %v1071 = vsub.f32 %v1004, %v1066
        %v1072 = vsub.f32 %v1056, %v1069
        %v1073 = vmul.f32 %v1070, 1.442695
        %v1074 = vpow.pop %v1073
        %v1075 = vmul.f32 %v1071, 1.442695
        %v1076 = vpow.pop %v1075
        %v1077 = vmul.f32 %v1072, 1.442695
        %v1078 = vpow.pop %v1077
        %v1079 = vsel %vm712, %v1074, 0.0
        %1080 = vadd.xlane.f32.xlu0 %v1079
        %v1081 = vpop.xlane.xlu0 %1080
        %v1082 = vsel %vm712, %v1076, 0.0
        %1083 = vadd.xlane.f32.xlu0 %v1082
        %v1084 = vpop.xlane.xlu0 %1083
        %v1085 = vsel %vm712, %v1078, 0.0
        %1086 = vadd.xlane.f32.xlu0 %v1085
        %v1087 = vpop.xlane.xlu0 %1086
        %v1088 = vrcp.pop %v1081
        %v1089 = vrcp.pop %v1084
        %v1090 = vrcp.pop %v1087
        %v1091 = vmul.f32 %v1074, %v1088
        %v1092 = vmul.f32 %v1076, %v1089
        %v1093 = vmul.f32 %v1078, %v1090
        %v1094 = vpack.c.bf16 %v1091, %v1091
        %v1095 = vpack.c.bf16 %v1092, %v1092
        %v1096 = vpack.c.bf16 %v1093, %v1093
        %1098 = vrot.lane.b32.xlu0 %v570, 96
        %v1099 = vpop.permute.xlu0 %1098
        %v1101 = vsel %vm712, %v1094, 0
        %v1104 = vsel %vm752, %v1099, 0
        %1106 = vmatprep.subr.bf16.mxu0 0
        %1107 = vmatpush1.bf16.msra.mxu0 0
        %1108 = vmatprep.subr.bf16.mxu0 0
        %1109 = vmatpush1.bf16.msra.mxu0 0
        %1110 = vmatprep.subr.bf16.mxu0 0
        %1111 = vmatpush1.bf16.msra.mxu0 0
        %1112 = vmatprep.subr.bf16.mxu0 0
        %1113 = vmatpush1.bf16.msra.mxu0 0
        %1114 = vmatprep.subr.bf16.mxu0 0
        %1115 = vmatpush1.bf16.msra.mxu0 0
        %1116 = vmatprep.subr.bf16.mxu0 0
        %1117 = vmatpush1.bf16.msra.mxu0 0
        %1118 = vmatprep.subr.bf16.mxu0 0
        %1119 = vmatpush1.bf16.msra.mxu0 0
        %1120 = vmatprep.subr.bf16.mxu0 0
        %1121 = vmatpush1.bf16.msra.mxu0 %v1104
        %1122 = vmatprep.subr.bf16.mxu0 0
        %1123 = vmatpush2.bf16.msra.mxu0 0
        %1124 = vmatprep.subr.bf16.mxu0 0
        %1125 = vmatpush2.bf16.msra.mxu0 0
        %1126 = vmatprep.subr.bf16.mxu0 0
        %1127 = vmatpush2.bf16.msra.mxu0 0
        %1128 = vmatprep.subr.bf16.mxu0 0
        %1129 = vmatpush2.bf16.msra.mxu0 0
        %1130 = vmatprep.subr.bf16.mxu0 0
        %1131 = vmatpush2.bf16.msra.mxu0 0
        %1132 = vmatprep.subr.bf16.mxu0 0
        %1133 = vmatpush2.bf16.msra.mxu0 0
        %1134 = vmatprep.subr.bf16.mxu0 0
        %1135 = vmatpush2.bf16.msra.mxu0 0
        %1136 = vmatprep.subr.bf16.mxu0 0
        %1137 = vmatpush2.bf16.msra.mxu0 0
        %1138 = vmatprep.mubr.bf16.mxu0 0
        %1139 = vmatmul.mubr.bf16.gmra.mxu0 %v1101
        %v1140 = vpop.f32.mrf.mxu0
        %v1141 = vadd.f32 0.0, %v1140
        %v1142 = vpop.f32.mrf.mxu0
        %v1143 = vpop.f32.mrf.mxu0
        %v1144 = vpop.f32.mrf.mxu0
        %1145 = vdwg.mxu0
        %1147 = vrot.lane.b32.xlu0 %v571, 96
        %v1148 = vpop.permute.xlu0 %1147
        %v1150 = vsel %vm712, %v1095, 0
        %v1153 = vsel %vm752, %v1148, 0
        %1155 = vmatprep.subr.bf16.mxu0 0
        %1156 = vmatpush1.bf16.msra.mxu0 0
        %1157 = vmatprep.subr.bf16.mxu0 0
        %1158 = vmatpush1.bf16.msra.mxu0 0
        %1159 = vmatprep.subr.bf16.mxu0 0
        %1160 = vmatpush1.bf16.msra.mxu0 0
        %1161 = vmatprep.subr.bf16.mxu0 0
        %1162 = vmatpush1.bf16.msra.mxu0 0
        %1163 = vmatprep.subr.bf16.mxu0 0
        %1164 = vmatpush1.bf16.msra.mxu0 0
        %1165 = vmatprep.subr.bf16.mxu0 0
        %1166 = vmatpush1.bf16.msra.mxu0 0
        %1167 = vmatprep.subr.bf16.mxu0 0
        %1168 = vmatpush1.bf16.msra.mxu0 0
        %1169 = vmatprep.subr.bf16.mxu0 0
        %1170 = vmatpush1.bf16.msra.mxu0 %v1153
        %1171 = vmatprep.subr.bf16.mxu0 0
        %1172 = vmatpush2.bf16.msra.mxu0 0
        %1173 = vmatprep.subr.bf16.mxu0 0
        %1174 = vmatpush2.bf16.msra.mxu0 0
        %1175 = vmatprep.subr.bf16.mxu0 0
        %1176 = vmatpush2.bf16.msra.mxu0 0
        %1177 = vmatprep.subr.bf16.mxu0 0
        %1178 = vmatpush2.bf16.msra.mxu0 0
        %1179 = vmatprep.subr.bf16.mxu0 0
        %1180 = vmatpush2.bf16.msra.mxu0 0
        %1181 = vmatprep.subr.bf16.mxu0 0
        %1182 = vmatpush2.bf16.msra.mxu0 0
        %1183 = vmatprep.subr.bf16.mxu0 0
        %1184 = vmatpush2.bf16.msra.mxu0 0
        %1185 = vmatprep.subr.bf16.mxu0 0
        %1186 = vmatpush2.bf16.msra.mxu0 0
        %1187 = vmatprep.mubr.bf16.mxu0 0
        %1188 = vmatmul.mubr.bf16.gmra.mxu0 %v1150
        %v1189 = vpop.f32.mrf.mxu0
        %v1190 = vadd.f32 0.0, %v1189
        %v1191 = vpop.f32.mrf.mxu0
        %v1192 = vpop.f32.mrf.mxu0
        %v1193 = vpop.f32.mrf.mxu0
        %1194 = vdwg.mxu0
        %1196 = vrot.lane.b32.xlu0 %v572, 96
        %v1197 = vpop.permute.xlu0 %1196
        %v1199 = vsel %vm712, %v1096, 0
        %v1202 = vsel %vm752, %v1197, 0
        %1204 = vmatprep.subr.bf16.mxu0 0
        %1205 = vmatpush1.bf16.msra.mxu0 0
        %1206 = vmatprep.subr.bf16.mxu0 0
        %1207 = vmatpush1.bf16.msra.mxu0 0
        %1208 = vmatprep.subr.bf16.mxu0 0
        %1209 = vmatpush1.bf16.msra.mxu0 0
        %1210 = vmatprep.subr.bf16.mxu0 0
        %1211 = vmatpush1.bf16.msra.mxu0 0
        %1212 = vmatprep.subr.bf16.mxu0 0
        %1213 = vmatpush1.bf16.msra.mxu0 0
        %1214 = vmatprep.subr.bf16.mxu0 0
        %1215 = vmatpush1.bf16.msra.mxu0 0
        %1216 = vmatprep.subr.bf16.mxu0 0
        %1217 = vmatpush1.bf16.msra.mxu0 0
        %1218 = vmatprep.subr.bf16.mxu0 0
        %1219 = vmatpush1.bf16.msra.mxu0 %v1202
        %1220 = vmatprep.subr.bf16.mxu0 0
        %1221 = vmatpush2.bf16.msra.mxu0 0
        %1222 = vmatprep.subr.bf16.mxu0 0
        %1223 = vmatpush2.bf16.msra.mxu0 0
        %1224 = vmatprep.subr.bf16.mxu0 0
        %1225 = vmatpush2.bf16.msra.mxu0 0
        %1226 = vmatprep.subr.bf16.mxu0 0
        %1227 = vmatpush2.bf16.msra.mxu0 0
        %1228 = vmatprep.subr.bf16.mxu0 0
        %1229 = vmatpush2.bf16.msra.mxu0 0
        %1230 = vmatprep.subr.bf16.mxu0 0
        %1231 = vmatpush2.bf16.msra.mxu0 0
        %1232 = vmatprep.subr.bf16.mxu0 0
        %1233 = vmatpush2.bf16.msra.mxu0 0
        %1234 = vmatprep.subr.bf16.mxu0 0
        %1235 = vmatpush2.bf16.msra.mxu0 0
        %1236 = vmatprep.mubr.bf16.mxu0 0
        %1237 = vmatmul.mubr.bf16.gmra.mxu0 %v1199
        %v1238 = vpop.f32.mrf.mxu0
        %v1239 = vadd.f32 0.0, %v1238
        %v1240 = vpop.f32.mrf.mxu0
        %v1241 = vpop.f32.mrf.mxu0
        %v1242 = vpop.f32.mrf.mxu0
        %1243 = vdwg.mxu0
        %v1244 = vpack.c.bf16 %v1190, %v1141
        %v1245 = vpack.c.bf16 %v1239, %v1239
        %v1248 = vunpack.c.l.b16 %v1244
        %v1249 = vunpack.c.h.b16 %v1244
        %v1250 = vunpack.c.l.b16 %v1245
        %v1251 = vpack.c.b16 %v1248, %v1248
        %v1252 = vpack.c.b16 %v1249, %v1249
        %v1253 = vpack.c.b16 %v1250, %v1250
        %1254 = vrot.lane.b32.xlu0 %v1251, 32
        %v1255 = vpop.permute.xlu0 %1254
        %1256 = vrot.lane.b32.xlu0 %v1252, 32
        %v1257 = vpop.permute.xlu0 %1256
        %1258 = vrot.lane.b32.xlu0 %v1253, 32
        %v1259 = vpop.permute.xlu0 %1258
        %vm1263 = vcmask 519424
        %1264 = vst.msk [vmem:[#allocation2] sm:$0xf] %vm1263, %v1255
        %1265 = vst.msk [vmem:[#allocation2 + $0x4] sm:$0xf] %vm1263, %v1257
        %1266 = vst.msk [vmem:[#allocation2 + $0x8] sm:$0xf] %vm1263, %v1259
        %1267 = vrot.lane.b32.xlu0 %v564, 64
        %v1268 = vpop.permute.xlu0 %1267
        %1269 = vrot.lane.b32.xlu0 %v567, 64
        %v1270 = vpop.permute.xlu0 %1269
        %v1272 = vsel %vm573, %v1268, 0
        %v1275 = vsel %vm573, %v1270, 0
        %1277 = vmatprep.subr.bf16.mxu0 0
        %1278 = vmatpush1.bf16.xpose.msra.mxu0 0
        %1279 = vmatprep.subr.bf16.mxu0 0
        %1280 = vmatpush1.bf16.xpose.msra.mxu0 0
        %1281 = vmatprep.subr.bf16.mxu0 0
        %1282 = vmatpush1.bf16.xpose.msra.mxu0 0
        %1283 = vmatprep.subr.bf16.mxu0 0
        %1284 = vmatpush1.bf16.xpose.msra.mxu0 0
        %1285 = vmatprep.subr.bf16.mxu0 0
        %1286 = vmatpush1.bf16.xpose.msra.mxu0 0
        %1287 = vmatprep.subr.bf16.mxu0 0
        %1288 = vmatpush1.bf16.xpose.msra.mxu0 0
        %1289 = vmatprep.subr.bf16.mxu0 0
        %1290 = vmatpush1.bf16.xpose.msra.mxu0 0
        %1291 = vmatprep.subr.bf16.mxu0 0
        %1292 = vmatpush1.bf16.xpose.msra.mxu0 %v1275
        %1293 = vmatprep.subr.bf16.mxu0 0
        %1294 = vmatpush2.bf16.xpose.msra.mxu0 0
        %1295 = vmatprep.subr.bf16.mxu0 0
        %1296 = vmatpush2.bf16.xpose.msra.mxu0 0
        %1297 = vmatprep.subr.bf16.mxu0 0
        %1298 = vmatpush2.bf16.xpose.msra.mxu0 0
        %1299 = vmatprep.subr.bf16.mxu0 0
        %1300 = vmatpush2.bf16.xpose.msra.mxu0 0
        %1301 = vmatprep.subr.bf16.mxu0 0
        %1302 = vmatpush2.bf16.xpose.msra.mxu0 0
        %1303 = vmatprep.subr.bf16.mxu0 0
        %1304 = vmatpush2.bf16.xpose.msra.mxu0 0
        %1305 = vmatprep.subr.bf16.mxu0 0
        %1306 = vmatpush2.bf16.xpose.msra.mxu0 0
        %1307 = vmatprep.subr.bf16.mxu0 0
        %1308 = vmatpush2.bf16.xpose.msra.mxu0 0
        %1309 = vmatprep.mubr.bf16.mxu0 0
        %1310 = vmatmul.mubr.bf16.gmra.mxu0 %v1272
        %v1311 = vpop.f32.mrf.mxu0
        %v1312 = vadd.f32 0.0, %v1311
        %v1313 = vpop.f32.mrf.mxu0
        %v1314 = vpop.f32.mrf.mxu0
        %v1315 = vpop.f32.mrf.mxu0
        %1316 = vdwg.mxu0
        %1317 = vrot.lane.b32.xlu0 %v565, 64
        %v1318 = vpop.permute.xlu0 %1317
        %1319 = vrot.lane.b32.xlu0 %v568, 64
        %v1320 = vpop.permute.xlu0 %1319
        %v1322 = vsel %vm573, %v1318, 0
        %v1325 = vsel %vm573, %v1320, 0
        %1327 = vmatprep.subr.bf16.mxu0 0
        %1328 = vmatpush1.bf16.xpose.msra.mxu0 0
        %1329 = vmatprep.subr.bf16.mxu0 0
        %1330 = vmatpush1.bf16.xpose.msra.mxu0 0
        %1331 = vmatprep.subr.bf16.mxu0 0
        %1332 = vmatpush1.bf16.xpose.msra.mxu0 0
        %1333 = vmatprep.subr.bf16.mxu0 0
        %1334 = vmatpush1.bf16.xpose.msra.mxu0 0
        %1335 = vmatprep.subr.bf16.mxu0 0
        %1336 = vmatpush1.bf16.xpose.msra.mxu0 0
        %1337 = vmatprep.subr.bf16.mxu0 0
        %1338 = vmatpush1.bf16.xpose.msra.mxu0 0
        %1339 = vmatprep.subr.bf16.mxu0 0
        %1340 = vmatpush1.bf16.xpose.msra.mxu0 0
        %1341 = vmatprep.subr.bf16.mxu0 0
        %1342 = vmatpush1.bf16.xpose.msra.mxu0 %v1325
        %1343 = vmatprep.subr.bf16.mxu0 0
        %1344 = vmatpush2.bf16.xpose.msra.mxu0 0
        %1345 = vmatprep.subr.bf16.mxu0 0
        %1346 = vmatpush2.bf16.xpose.msra.mxu0 0
        %1347 = vmatprep.subr.bf16.mxu0 0
        %1348 = vmatpush2.bf16.xpose.msra.mxu0 0
        %1349 = vmatprep.subr.bf16.mxu0 0
        %1350 = vmatpush2.bf16.xpose.msra.mxu0 0
        %1351 = vmatprep.subr.bf16.mxu0 0
        %1352 = vmatpush2.bf16.xpose.msra.mxu0 0
        %1353 = vmatprep.subr.bf16.mxu0 0
        %1354 = vmatpush2.bf16.xpose.msra.mxu0 0
        %1355 = vmatprep.subr.bf16.mxu0 0
        %1356 = vmatpush2.bf16.xpose.msra.mxu0 0
        %1357 = vmatprep.subr.bf16.mxu0 0
        %1358 = vmatpush2.bf16.xpose.msra.mxu0 0
        %1359 = vmatprep.mubr.bf16.mxu0 0
        %1360 = vmatmul.mubr.bf16.gmra.mxu0 %v1322
        %v1361 = vpop.f32.mrf.mxu0
        %v1362 = vadd.f32 0.0, %v1361
        %v1363 = vpop.f32.mrf.mxu0
        %v1364 = vpop.f32.mrf.mxu0
        %v1365 = vpop.f32.mrf.mxu0
        %1366 = vdwg.mxu0
        %1367 = vrot.lane.b32.xlu0 %v566, 64
        %v1368 = vpop.permute.xlu0 %1367
        %1369 = vrot.lane.b32.xlu0 %v569, 64
        %v1370 = vpop.permute.xlu0 %1369
        %v1372 = vsel %vm573, %v1368, 0
        %v1375 = vsel %vm573, %v1370, 0
        %1377 = vmatprep.subr.bf16.mxu0 0
        %1378 = vmatpush1.bf16.xpose.msra.mxu0 0
        %1379 = vmatprep.subr.bf16.mxu0 0
        %1380 = vmatpush1.bf16.xpose.msra.mxu0 0
        %1381 = vmatprep.subr.bf16.mxu0 0
        %1382 = vmatpush1.bf16.xpose.msra.mxu0 0
        %1383 = vmatprep.subr.bf16.mxu0 0
        %1384 = vmatpush1.bf16.xpose.msra.mxu0 0
        %1385 = vmatprep.subr.bf16.mxu0 0
        %1386 = vmatpush1.bf16.xpose.msra.mxu0 0
        %1387 = vmatprep.subr.bf16.mxu0 0
        %1388 = vmatpush1.bf16.xpose.msra.mxu0 0
        %1389 = vmatprep.subr.bf16.mxu0 0
        %1390 = vmatpush1.bf16.xpose.msra.mxu0 0
        %1391 = vmatprep.subr.bf16.mxu0 0
        %1392 = vmatpush1.bf16.xpose.msra.mxu0 %v1375
        %1393 = vmatprep.subr.bf16.mxu0 0
        %1394 = vmatpush2.bf16.xpose.msra.mxu0 0
        %1395 = vmatprep.subr.bf16.mxu0 0
        %1396 = vmatpush2.bf16.xpose.msra.mxu0 0
        %1397 = vmatprep.subr.bf16.mxu0 0
        %1398 = vmatpush2.bf16.xpose.msra.mxu0 0
        %1399 = vmatprep.subr.bf16.mxu0 0
        %1400 = vmatpush2.bf16.xpose.msra.mxu0 0
        %1401 = vmatprep.subr.bf16.mxu0 0
        %1402 = vmatpush2.bf16.xpose.msra.mxu0 0
        %1403 = vmatprep.subr.bf16.mxu0 0
        %1404 = vmatpush2.bf16.xpose.msra.mxu0 0
        %1405 = vmatprep.subr.bf16.mxu0 0
        %1406 = vmatpush2.bf16.xpose.msra.mxu0 0
        %1407 = vmatprep.subr.bf16.mxu0 0
        %1408 = vmatpush2.bf16.xpose.msra.mxu0 0
        %1409 = vmatprep.mubr.bf16.mxu0 0
        %1410 = vmatmul.mubr.bf16.gmra.mxu0 %v1372
        %v1411 = vpop.f32.mrf.mxu0
        %v1412 = vadd.f32 0.0, %v1411
        %v1413 = vpop.f32.mrf.mxu0
        %v1414 = vpop.f32.mrf.mxu0
        %v1415 = vpop.f32.mrf.mxu0
        %1416 = vdwg.mxu0
        %v1417 = vsel %vm712, %v1312, -inf
        %1418 = vmax.xlane.f32.xlu0 %v1417
        %v1419 = vpop.xlane.xlu0 %1418
        %v1420 = vsel %vm712, %v1362, -inf
        %1421 = vmax.xlane.f32.xlu0 %v1420
        %v1422 = vpop.xlane.xlu0 %1421
        %v1423 = vsel %vm712, %v1412, -inf
        %1424 = vmax.xlane.f32.xlu0 %v1423
        %v1425 = vpop.xlane.xlu0 %1424
        %v1426 = vsub.f32 %v1312, %v1419
        %v1427 = vsub.f32 %v1362, %v1422
        %v1428 = vsub.f32 %v1412, %v1425
        %v1429 = vmul.f32 %v1426, 1.442695
        %v1430 = vpow.pop %v1429
        %v1431 = vmul.f32 %v1427, 1.442695
        %v1432 = vpow.pop %v1431
        %v1433 = vmul.f32 %v1428, 1.442695
        %v1434 = vpow.pop %v1433
        %v1435 = vsel %vm712, %v1430, 0.0
        %1436 = vadd.xlane.f32.xlu0 %v1435
        %v1437 = vpop.xlane.xlu0 %1436
        %v1438 = vsel %vm712, %v1432, 0.0
        %1439 = vadd.xlane.f32.xlu0 %v1438
        %v1440 = vpop.xlane.xlu0 %1439
        %v1441 = vsel %vm712, %v1434, 0.0
        %1442 = vadd.xlane.f32.xlu0 %v1441
        %v1443 = vpop.xlane.xlu0 %1442
        %v1444 = vrcp.pop %v1437
        %v1445 = vrcp.pop %v1440
        %v1446 = vrcp.pop %v1443
        %v1447 = vmul.f32 %v1430, %v1444
        %v1448 = vmul.f32 %v1432, %v1445
        %v1449 = vmul.f32 %v1434, %v1446
        %v1450 = vpack.c.bf16 %v1447, %v1447
        %v1451 = vpack.c.bf16 %v1448, %v1448
        %v1452 = vpack.c.bf16 %v1449, %v1449
        %1453 = vrot.lane.b32.xlu0 %v570, 64
        %v1454 = vpop.permute.xlu0 %1453
        %v1456 = vsel %vm712, %v1450, 0
        %v1459 = vsel %vm752, %v1454, 0
        %1461 = vmatprep.subr.bf16.mxu0 0
        %1462 = vmatpush1.bf16.msra.mxu0 0
        %1463 = vmatprep.subr.bf16.mxu0 0
        %1464 = vmatpush1.bf16.msra.mxu0 0
        %1465 = vmatprep.subr.bf16.mxu0 0
        %1466 = vmatpush1.bf16.msra.mxu0 0
        %1467 = vmatprep.subr.bf16.mxu0 0
        %1468 = vmatpush1.bf16.msra.mxu0 0
        %1469 = vmatprep.subr.bf16.mxu0 0
        %1470 = vmatpush1.bf16.msra.mxu0 0
        %1471 = vmatprep.subr.bf16.mxu0 0
        %1472 = vmatpush1.bf16.msra.mxu0 0
        %1473 = vmatprep.subr.bf16.mxu0 0
        %1474 = vmatpush1.bf16.msra.mxu0 0
        %1475 = vmatprep.subr.bf16.mxu0 0
        %1476 = vmatpush1.bf16.msra.mxu0 %v1459
        %1477 = vmatprep.subr.bf16.mxu0 0
        %1478 = vmatpush2.bf16.msra.mxu0 0
        %1479 = vmatprep.subr.bf16.mxu0 0
        %1480 = vmatpush2.bf16.msra.mxu0 0
        %1481 = vmatprep.subr.bf16.mxu0 0
        %1482 = vmatpush2.bf16.msra.mxu0 0
        %1483 = vmatprep.subr.bf16.mxu0 0
        %1484 = vmatpush2.bf16.msra.mxu0 0
        %1485 = vmatprep.subr.bf16.mxu0 0
        %1486 = vmatpush2.bf16.msra.mxu0 0
        %1487 = vmatprep.subr.bf16.mxu0 0
        %1488 = vmatpush2.bf16.msra.mxu0 0
        %1489 = vmatprep.subr.bf16.mxu0 0
        %1490 = vmatpush2.bf16.msra.mxu0 0
        %1491 = vmatprep.subr.bf16.mxu0 0
        %1492 = vmatpush2.bf16.msra.mxu0 0
        %1493 = vmatprep.mubr.bf16.mxu0 0
        %1494 = vmatmul.mubr.bf16.gmra.mxu0 %v1456
        %v1495 = vpop.f32.mrf.mxu0
        %v1496 = vadd.f32 0.0, %v1495
        %v1497 = vpop.f32.mrf.mxu0
        %v1498 = vpop.f32.mrf.mxu0
        %v1499 = vpop.f32.mrf.mxu0
        %1500 = vdwg.mxu0
        %1501 = vrot.lane.b32.xlu0 %v571, 64
        %v1502 = vpop.permute.xlu0 %1501
        %v1504 = vsel %vm712, %v1451, 0
        %v1507 = vsel %vm752, %v1502, 0
        %1509 = vmatprep.subr.bf16.mxu0 0
        %1510 = vmatpush1.bf16.msra.mxu0 0
        %1511 = vmatprep.subr.bf16.mxu0 0
        %1512 = vmatpush1.bf16.msra.mxu0 0
        %1513 = vmatprep.subr.bf16.mxu0 0
        %1514 = vmatpush1.bf16.msra.mxu0 0
        %1515 = vmatprep.subr.bf16.mxu0 0
        %1516 = vmatpush1.bf16.msra.mxu0 0
        %1517 = vmatprep.subr.bf16.mxu0 0
        %1518 = vmatpush1.bf16.msra.mxu0 0
        %1519 = vmatprep.subr.bf16.mxu0 0
        %1520 = vmatpush1.bf16.msra.mxu0 0
        %1521 = vmatprep.subr.bf16.mxu0 0
        %1522 = vmatpush1.bf16.msra.mxu0 0
        %1523 = vmatprep.subr.bf16.mxu0 0
        %1524 = vmatpush1.bf16.msra.mxu0 %v1507
        %1525 = vmatprep.subr.bf16.mxu0 0
        %1526 = vmatpush2.bf16.msra.mxu0 0
        %1527 = vmatprep.subr.bf16.mxu0 0
        %1528 = vmatpush2.bf16.msra.mxu0 0
        %1529 = vmatprep.subr.bf16.mxu0 0
        %1530 = vmatpush2.bf16.msra.mxu0 0
        %1531 = vmatprep.subr.bf16.mxu0 0
        %1532 = vmatpush2.bf16.msra.mxu0 0
        %1533 = vmatprep.subr.bf16.mxu0 0
        %1534 = vmatpush2.bf16.msra.mxu0 0
        %1535 = vmatprep.subr.bf16.mxu0 0
        %1536 = vmatpush2.bf16.msra.mxu0 0
        %1537 = vmatprep.subr.bf16.mxu0 0
        %1538 = vmatpush2.bf16.msra.mxu0 0
        %1539 = vmatprep.subr.bf16.mxu0 0
        %1540 = vmatpush2.bf16.msra.mxu0 0
        %1541 = vmatprep.mubr.bf16.mxu0 0
        %1542 = vmatmul.mubr.bf16.gmra.mxu0 %v1504
        %v1543 = vpop.f32.mrf.mxu0
        %v1544 = vadd.f32 0.0, %v1543
        %v1545 = vpop.f32.mrf.mxu0
        %v1546 = vpop.f32.mrf.mxu0
        %v1547 = vpop.f32.mrf.mxu0
        %1548 = vdwg.mxu0
        %1549 = vrot.lane.b32.xlu0 %v572, 64
        %v1550 = vpop.permute.xlu0 %1549
        %v1552 = vsel %vm712, %v1452, 0
        %v1555 = vsel %vm752, %v1550, 0
        %1557 = vmatprep.subr.bf16.mxu0 0
        %1558 = vmatpush1.bf16.msra.mxu0 0
        %1559 = vmatprep.subr.bf16.mxu0 0
        %1560 = vmatpush1.bf16.msra.mxu0 0
        %1561 = vmatprep.subr.bf16.mxu0 0
        %1562 = vmatpush1.bf16.msra.mxu0 0
        %1563 = vmatprep.subr.bf16.mxu0 0
        %1564 = vmatpush1.bf16.msra.mxu0 0
        %1565 = vmatprep.subr.bf16.mxu0 0
        %1566 = vmatpush1.bf16.msra.mxu0 0
        %1567 = vmatprep.subr.bf16.mxu0 0
        %1568 = vmatpush1.bf16.msra.mxu0 0
        %1569 = vmatprep.subr.bf16.mxu0 0
        %1570 = vmatpush1.bf16.msra.mxu0 0
        %1571 = vmatprep.subr.bf16.mxu0 0
        %1572 = vmatpush1.bf16.msra.mxu0 %v1555
        %1573 = vmatprep.subr.bf16.mxu0 0
        %1574 = vmatpush2.bf16.msra.mxu0 0
        %1575 = vmatprep.subr.bf16.mxu0 0
        %1576 = vmatpush2.bf16.msra.mxu0 0
        %1577 = vmatprep.subr.bf16.mxu0 0
        %1578 = vmatpush2.bf16.msra.mxu0 0
        %1579 = vmatprep.subr.bf16.mxu0 0
        %1580 = vmatpush2.bf16.msra.mxu0 0
        %1581 = vmatprep.subr.bf16.mxu0 0
        %1582 = vmatpush2.bf16.msra.mxu0 0
        %1583 = vmatprep.subr.bf16.mxu0 0
        %1584 = vmatpush2.bf16.msra.mxu0 0
        %1585 = vmatprep.subr.bf16.mxu0 0
        %1586 = vmatpush2.bf16.msra.mxu0 0
        %1587 = vmatprep.subr.bf16.mxu0 0
        %1588 = vmatpush2.bf16.msra.mxu0 0
        %1589 = vmatprep.mubr.bf16.mxu0 0
        %1590 = vmatmul.mubr.bf16.gmra.mxu0 %v1552
        %v1591 = vpop.f32.mrf.mxu0
        %v1592 = vadd.f32 0.0, %v1591
        %v1593 = vpop.f32.mrf.mxu0
        %v1594 = vpop.f32.mrf.mxu0
        %v1595 = vpop.f32.mrf.mxu0
        %1596 = vdwg.mxu0
        %v1597 = vpack.c.bf16 %v1544, %v1496
        %v1598 = vpack.c.bf16 %v1592, %v1592
        %v1601 = vunpack.c.l.b16 %v1597
        %v1602 = vunpack.c.h.b16 %v1597
        %v1603 = vunpack.c.l.b16 %v1598
        %v1604 = vpack.c.b16 %v1601, %v1601
        %v1605 = vpack.c.b16 %v1602, %v1602
        %v1606 = vpack.c.b16 %v1603, %v1603
        %1607 = vrot.lane.b32.xlu0 %v1604, 64
        %v1608 = vpop.permute.xlu0 %1607
        %1609 = vrot.lane.b32.xlu0 %v1605, 64
        %v1610 = vpop.permute.xlu0 %1609
        %1611 = vrot.lane.b32.xlu0 %v1606, 64
        %v1612 = vpop.permute.xlu0 %1611
        %vm1616 = vcmask 781824
        %1617 = vst.msk [vmem:[#allocation2] sm:$0xf] %vm1616, %v1608
        %1618 = vst.msk [vmem:[#allocation2 + $0x4] sm:$0xf] %vm1616, %v1610
        %1619 = vst.msk [vmem:[#allocation2 + $0x8] sm:$0xf] %vm1616, %v1612
        %1620 = vrot.lane.b32.xlu0 %v564, 32
        %v1621 = vpop.permute.xlu0 %1620
        %1622 = vrot.lane.b32.xlu0 %v567, 32
        %v1623 = vpop.permute.xlu0 %1622
        %v1625 = vsel %vm573, %v1621, 0
        %v1628 = vsel %vm573, %v1623, 0
        %1630 = vmatprep.subr.bf16.mxu0 0
        %1631 = vmatpush1.bf16.xpose.msra.mxu0 0
        %1632 = vmatprep.subr.bf16.mxu0 0
        %1633 = vmatpush1.bf16.xpose.msra.mxu0 0
        %1634 = vmatprep.subr.bf16.mxu0 0
        %1635 = vmatpush1.bf16.xpose.msra.mxu0 0
        %1636 = vmatprep.subr.bf16.mxu0 0
        %1637 = vmatpush1.bf16.xpose.msra.mxu0 0
        %1638 = vmatprep.subr.bf16.mxu0 0
        %1639 = vmatpush1.bf16.xpose.msra.mxu0 0
        %1640 = vmatprep.subr.bf16.mxu0 0
        %1641 = vmatpush1.bf16.xpose.msra.mxu0 0
        %1642 = vmatprep.subr.bf16.mxu0 0
        %1643 = vmatpush1.bf16.xpose.msra.mxu0 0
        %1644 = vmatprep.subr.bf16.mxu0 0
        %1645 = vmatpush1.bf16.xpose.msra.mxu0 %v1628
        %1646 = vmatprep.subr.bf16.mxu0 0
        %1647 = vmatpush2.bf16.xpose.msra.mxu0 0
        %1648 = vmatprep.subr.bf16.mxu0 0
        %1649 = vmatpush2.bf16.xpose.msra.mxu0 0
        %1650 = vmatprep.subr.bf16.mxu0 0
        %1651 = vmatpush2.bf16.xpose.msra.mxu0 0
        %1652 = vmatprep.subr.bf16.mxu0 0
        %1653 = vmatpush2.bf16.xpose.msra.mxu0 0
        %1654 = vmatprep.subr.bf16.mxu0 0
        %1655 = vmatpush2.bf16.xpose.msra.mxu0 0
        %1656 = vmatprep.subr.bf16.mxu0 0
        %1657 = vmatpush2.bf16.xpose.msra.mxu0 0
        %1658 = vmatprep.subr.bf16.mxu0 0
        %1659 = vmatpush2.bf16.xpose.msra.mxu0 0
        %1660 = vmatprep.subr.bf16.mxu0 0
        %1661 = vmatpush2.bf16.xpose.msra.mxu0 0
        %1662 = vmatprep.mubr.bf16.mxu0 0
        %1663 = vmatmul.mubr.bf16.gmra.mxu0 %v1625
        %v1664 = vpop.f32.mrf.mxu0
        %v1665 = vadd.f32 0.0, %v1664
        %v1666 = vpop.f32.mrf.mxu0
        %v1667 = vpop.f32.mrf.mxu0
        %v1668 = vpop.f32.mrf.mxu0
        %1669 = vdwg.mxu0
        %1670 = vrot.lane.b32.xlu0 %v565, 32
        %v1671 = vpop.permute.xlu0 %1670
        %1672 = vrot.lane.b32.xlu0 %v568, 32
        %v1673 = vpop.permute.xlu0 %1672
        %v1675 = vsel %vm573, %v1671, 0
        %v1678 = vsel %vm573, %v1673, 0
        %1680 = vmatprep.subr.bf16.mxu0 0
        %1681 = vmatpush1.bf16.xpose.msra.mxu0 0
        %1682 = vmatprep.subr.bf16.mxu0 0
        %1683 = vmatpush1.bf16.xpose.msra.mxu0 0
        %1684 = vmatprep.subr.bf16.mxu0 0
        %1685 = vmatpush1.bf16.xpose.msra.mxu0 0
        %1686 = vmatprep.subr.bf16.mxu0 0
        %1687 = vmatpush1.bf16.xpose.msra.mxu0 0
        %1688 = vmatprep.subr.bf16.mxu0 0
        %1689 = vmatpush1.bf16.xpose.msra.mxu0 0
        %1690 = vmatprep.subr.bf16.mxu0 0
        %1691 = vmatpush1.bf16.xpose.msra.mxu0 0
        %1692 = vmatprep.subr.bf16.mxu0 0
        %1693 = vmatpush1.bf16.xpose.msra.mxu0 0
        %1694 = vmatprep.subr.bf16.mxu0 0
        %1695 = vmatpush1.bf16.xpose.msra.mxu0 %v1678
        %1696 = vmatprep.subr.bf16.mxu0 0
        %1697 = vmatpush2.bf16.xpose.msra.mxu0 0
        %1698 = vmatprep.subr.bf16.mxu0 0
        %1699 = vmatpush2.bf16.xpose.msra.mxu0 0
        %1700 = vmatprep.subr.bf16.mxu0 0
        %1701 = vmatpush2.bf16.xpose.msra.mxu0 0
        %1702 = vmatprep.subr.bf16.mxu0 0
        %1703 = vmatpush2.bf16.xpose.msra.mxu0 0
        %1704 = vmatprep.subr.bf16.mxu0 0
        %1705 = vmatpush2.bf16.xpose.msra.mxu0 0
        %1706 = vmatprep.subr.bf16.mxu0 0
        %1707 = vmatpush2.bf16.xpose.msra.mxu0 0
        %1708 = vmatprep.subr.bf16.mxu0 0
        %1709 = vmatpush2.bf16.xpose.msra.mxu0 0
        %1710 = vmatprep.subr.bf16.mxu0 0
        %1711 = vmatpush2.bf16.xpose.msra.mxu0 0
        %1712 = vmatprep.mubr.bf16.mxu0 0
        %1713 = vmatmul.mubr.bf16.gmra.mxu0 %v1675
        %v1714 = vpop.f32.mrf.mxu0
        %v1715 = vadd.f32 0.0, %v1714
        %v1716 = vpop.f32.mrf.mxu0
        %v1717 = vpop.f32.mrf.mxu0
        %v1718 = vpop.f32.mrf.mxu0
        %1719 = vdwg.mxu0
        %1720 = vrot.lane.b32.xlu0 %v566, 32
        %v1721 = vpop.permute.xlu0 %1720
        %1722 = vrot.lane.b32.xlu0 %v569, 32
        %v1723 = vpop.permute.xlu0 %1722
        %v1725 = vsel %vm573, %v1721, 0
        %v1728 = vsel %vm573, %v1723, 0
        %1730 = vmatprep.subr.bf16.mxu0 0
        %1731 = vmatpush1.bf16.xpose.msra.mxu0 0
        %1732 = vmatprep.subr.bf16.mxu0 0
        %1733 = vmatpush1.bf16.xpose.msra.mxu0 0
        %1734 = vmatprep.subr.bf16.mxu0 0
        %1735 = vmatpush1.bf16.xpose.msra.mxu0 0
        %1736 = vmatprep.subr.bf16.mxu0 0
        %1737 = vmatpush1.bf16.xpose.msra.mxu0 0
        %1738 = vmatprep.subr.bf16.mxu0 0
        %1739 = vmatpush1.bf16.xpose.msra.mxu0 0
        %1740 = vmatprep.subr.bf16.mxu0 0
        %1741 = vmatpush1.bf16.xpose.msra.mxu0 0
        %1742 = vmatprep.subr.bf16.mxu0 0
        %1743 = vmatpush1.bf16.xpose.msra.mxu0 0
        %1744 = vmatprep.subr.bf16.mxu0 0
        %1745 = vmatpush1.bf16.xpose.msra.mxu0 %v1728
        %1746 = vmatprep.subr.bf16.mxu0 0
        %1747 = vmatpush2.bf16.xpose.msra.mxu0 0
        %1748 = vmatprep.subr.bf16.mxu0 0
        %1749 = vmatpush2.bf16.xpose.msra.mxu0 0
        %1750 = vmatprep.subr.bf16.mxu0 0
        %1751 = vmatpush2.bf16.xpose.msra.mxu0 0
        %1752 = vmatprep.subr.bf16.mxu0 0
        %1753 = vmatpush2.bf16.xpose.msra.mxu0 0
        %1754 = vmatprep.subr.bf16.mxu0 0
        %1755 = vmatpush2.bf16.xpose.msra.mxu0 0
        %1756 = vmatprep.subr.bf16.mxu0 0
        %1757 = vmatpush2.bf16.xpose.msra.mxu0 0
        %1758 = vmatprep.subr.bf16.mxu0 0
        %1759 = vmatpush2.bf16.xpose.msra.mxu0 0
        %1760 = vmatprep.subr.bf16.mxu0 0
        %1761 = vmatpush2.bf16.xpose.msra.mxu0 0
        %1762 = vmatprep.mubr.bf16.mxu0 0
        %1763 = vmatmul.mubr.bf16.gmra.mxu0 %v1725
        %v1764 = vpop.f32.mrf.mxu0
        %v1765 = vadd.f32 0.0, %v1764
        %v1766 = vpop.f32.mrf.mxu0
        %v1767 = vpop.f32.mrf.mxu0
        %v1768 = vpop.f32.mrf.mxu0
        %1769 = vdwg.mxu0
        %v1770 = vsel %vm712, %v1665, -inf
        %1771 = vmax.xlane.f32.xlu0 %v1770
        %v1772 = vpop.xlane.xlu0 %1771
        %v1773 = vsel %vm712, %v1715, -inf
        %1774 = vmax.xlane.f32.xlu0 %v1773
        %v1775 = vpop.xlane.xlu0 %1774
        %v1776 = vsel %vm712, %v1765, -inf
        %1777 = vmax.xlane.f32.xlu0 %v1776
        %v1778 = vpop.xlane.xlu0 %1777
        %v1779 = vsub.f32 %v1665, %v1772
        %v1780 = vsub.f32 %v1715, %v1775
        %v1781 = vsub.f32 %v1765, %v1778
        %v1782 = vmul.f32 %v1779, 1.442695
        %v1783 = vpow.pop %v1782
        %v1784 = vmul.f32 %v1780, 1.442695
        %v1785 = vpow.pop %v1784
        %v1786 = vmul.f32 %v1781, 1.442695
        %v1787 = vpow.pop %v1786
        %v1788 = vsel %vm712, %v1783, 0.0
        %1789 = vadd.xlane.f32.xlu0 %v1788
        %v1790 = vpop.xlane.xlu0 %1789
        %v1791 = vsel %vm712, %v1785, 0.0
        %1792 = vadd.xlane.f32.xlu0 %v1791
        %v1793 = vpop.xlane.xlu0 %1792
        %v1794 = vsel %vm712, %v1787, 0.0
        %1795 = vadd.xlane.f32.xlu0 %v1794
        %v1796 = vpop.xlane.xlu0 %1795
        %v1797 = vrcp.pop %v1790
        %v1798 = vrcp.pop %v1793
        %v1799 = vrcp.pop %v1796
        %v1800 = vmul.f32 %v1783, %v1797
        %v1801 = vmul.f32 %v1785, %v1798
        %v1802 = vmul.f32 %v1787, %v1799
        %v1803 = vpack.c.bf16 %v1800, %v1800
        %v1804 = vpack.c.bf16 %v1801, %v1801
        %v1805 = vpack.c.bf16 %v1802, %v1802
        %1806 = vrot.lane.b32.xlu0 %v570, 32
        %v1807 = vpop.permute.xlu0 %1806
        %v1809 = vsel %vm712, %v1803, 0
        %v1812 = vsel %vm752, %v1807, 0
        %1814 = vmatprep.subr.bf16.mxu0 0
        %1815 = vmatpush1.bf16.msra.mxu0 0
        %1816 = vmatprep.subr.bf16.mxu0 0
        %1817 = vmatpush1.bf16.msra.mxu0 0
        %1818 = vmatprep.subr.bf16.mxu0 0
        %1819 = vmatpush1.bf16.msra.mxu0 0
        %1820 = vmatprep.subr.bf16.mxu0 0
        %1821 = vmatpush1.bf16.msra.mxu0 0
        %1822 = vmatprep.subr.bf16.mxu0 0
        %1823 = vmatpush1.bf16.msra.mxu0 0
        %1824 = vmatprep.subr.bf16.mxu0 0
        %1825 = vmatpush1.bf16.msra.mxu0 0
        %1826 = vmatprep.subr.bf16.mxu0 0
        %1827 = vmatpush1.bf16.msra.mxu0 0
        %1828 = vmatprep.subr.bf16.mxu0 0
        %1829 = vmatpush1.bf16.msra.mxu0 %v1812
        %1830 = vmatprep.subr.bf16.mxu0 0
        %1831 = vmatpush2.bf16.msra.mxu0 0
        %1832 = vmatprep.subr.bf16.mxu0 0
        %1833 = vmatpush2.bf16.msra.mxu0 0
        %1834 = vmatprep.subr.bf16.mxu0 0
        %1835 = vmatpush2.bf16.msra.mxu0 0
        %1836 = vmatprep.subr.bf16.mxu0 0
        %1837 = vmatpush2.bf16.msra.mxu0 0
        %1838 = vmatprep.subr.bf16.mxu0 0
        %1839 = vmatpush2.bf16.msra.mxu0 0
        %1840 = vmatprep.subr.bf16.mxu0 0
        %1841 = vmatpush2.bf16.msra.mxu0 0
        %1842 = vmatprep.subr.bf16.mxu0 0
        %1843 = vmatpush2.bf16.msra.mxu0 0
        %1844 = vmatprep.subr.bf16.mxu0 0
        %1845 = vmatpush2.bf16.msra.mxu0 0
        %1846 = vmatprep.mubr.bf16.mxu0 0
        %1847 = vmatmul.mubr.bf16.gmra.mxu0 %v1809
        %v1848 = vpop.f32.mrf.mxu0
        %v1849 = vadd.f32 0.0, %v1848
        %v1850 = vpop.f32.mrf.mxu0
        %v1851 = vpop.f32.mrf.mxu0
        %v1852 = vpop.f32.mrf.mxu0
        %1853 = vdwg.mxu0
        %1854 = vrot.lane.b32.xlu0 %v571, 32
        %v1855 = vpop.permute.xlu0 %1854
        %v1857 = vsel %vm712, %v1804, 0
        %v1860 = vsel %vm752, %v1855, 0
        %1862 = vmatprep.subr.bf16.mxu0 0
        %1863 = vmatpush1.bf16.msra.mxu0 0
        %1864 = vmatprep.subr.bf16.mxu0 0
        %1865 = vmatpush1.bf16.msra.mxu0 0
        %1866 = vmatprep.subr.bf16.mxu0 0
        %1867 = vmatpush1.bf16.msra.mxu0 0
        %1868 = vmatprep.subr.bf16.mxu0 0
        %1869 = vmatpush1.bf16.msra.mxu0 0
        %1870 = vmatprep.subr.bf16.mxu0 0
        %1871 = vmatpush1.bf16.msra.mxu0 0
        %1872 = vmatprep.subr.bf16.mxu0 0
        %1873 = vmatpush1.bf16.msra.mxu0 0
        %1874 = vmatprep.subr.bf16.mxu0 0
        %1875 = vmatpush1.bf16.msra.mxu0 0
        %1876 = vmatprep.subr.bf16.mxu0 0
        %1877 = vmatpush1.bf16.msra.mxu0 %v1860
        %1878 = vmatprep.subr.bf16.mxu0 0
        %1879 = vmatpush2.bf16.msra.mxu0 0
        %1880 = vmatprep.subr.bf16.mxu0 0
        %1881 = vmatpush2.bf16.msra.mxu0 0
        %1882 = vmatprep.subr.bf16.mxu0 0
        %1883 = vmatpush2.bf16.msra.mxu0 0
        %1884 = vmatprep.subr.bf16.mxu0 0
        %1885 = vmatpush2.bf16.msra.mxu0 0
        %1886 = vmatprep.subr.bf16.mxu0 0
        %1887 = vmatpush2.bf16.msra.mxu0 0
        %1888 = vmatprep.subr.bf16.mxu0 0
        %1889 = vmatpush2.bf16.msra.mxu0 0
        %1890 = vmatprep.subr.bf16.mxu0 0
        %1891 = vmatpush2.bf16.msra.mxu0 0
        %1892 = vmatprep.subr.bf16.mxu0 0
        %1893 = vmatpush2.bf16.msra.mxu0 0
        %1894 = vmatprep.mubr.bf16.mxu0 0
        %1895 = vmatmul.mubr.bf16.gmra.mxu0 %v1857
        %v1896 = vpop.f32.mrf.mxu0
        %v1897 = vadd.f32 0.0, %v1896
        %v1898 = vpop.f32.mrf.mxu0
        %v1899 = vpop.f32.mrf.mxu0
        %v1900 = vpop.f32.mrf.mxu0
        %1901 = vdwg.mxu0
        %1902 = vrot.lane.b32.xlu0 %v572, 32
        %v1903 = vpop.permute.xlu0 %1902
        %v1905 = vsel %vm712, %v1805, 0
        %v1908 = vsel %vm752, %v1903, 0
        %1910 = vmatprep.subr.bf16.mxu0 0
        %1911 = vmatpush1.bf16.msra.mxu0 0
        %1912 = vmatprep.subr.bf16.mxu0 0
        %1913 = vmatpush1.bf16.msra.mxu0 0
        %1914 = vmatprep.subr.bf16.mxu0 0
        %1915 = vmatpush1.bf16.msra.mxu0 0
        %1916 = vmatprep.subr.bf16.mxu0 0
        %1917 = vmatpush1.bf16.msra.mxu0 0
        %1918 = vmatprep.subr.bf16.mxu0 0
        %1919 = vmatpush1.bf16.msra.mxu0 0
        %1920 = vmatprep.subr.bf16.mxu0 0
        %1921 = vmatpush1.bf16.msra.mxu0 0
        %1922 = vmatprep.subr.bf16.mxu0 0
        %1923 = vmatpush1.bf16.msra.mxu0 0
        %1924 = vmatprep.subr.bf16.mxu0 0
        %1925 = vmatpush1.bf16.msra.mxu0 %v1908
        %1926 = vmatprep.subr.bf16.mxu0 0
        %1927 = vmatpush2.bf16.msra.mxu0 0
        %1928 = vmatprep.subr.bf16.mxu0 0
        %1929 = vmatpush2.bf16.msra.mxu0 0
        %1930 = vmatprep.subr.bf16.mxu0 0
        %1931 = vmatpush2.bf16.msra.mxu0 0
        %1932 = vmatprep.subr.bf16.mxu0 0
        %1933 = vmatpush2.bf16.msra.mxu0 0
        %1934 = vmatprep.subr.bf16.mxu0 0
        %1935 = vmatpush2.bf16.msra.mxu0 0
        %1936 = vmatprep.subr.bf16.mxu0 0
        %1937 = vmatpush2.bf16.msra.mxu0 0
        %1938 = vmatprep.subr.bf16.mxu0 0
        %1939 = vmatpush2.bf16.msra.mxu0 0
        %1940 = vmatprep.subr.bf16.mxu0 0
        %1941 = vmatpush2.bf16.msra.mxu0 0
        %1942 = vmatprep.mubr.bf16.mxu0 0
        %1943 = vmatmul.mubr.bf16.gmra.mxu0 %v1905
        %v1944 = vpop.f32.mrf.mxu0
        %v1945 = vadd.f32 0.0, %v1944
        %v1946 = vpop.f32.mrf.mxu0
        %v1947 = vpop.f32.mrf.mxu0
        %v1948 = vpop.f32.mrf.mxu0
        %1949 = vdwg.mxu0
        %v1950 = vpack.c.bf16 %v1897, %v1849
        %v1951 = vpack.c.bf16 %v1945, %v1945
        %v1954 = vunpack.c.l.b16 %v1950
        %v1955 = vunpack.c.h.b16 %v1950
        %v1956 = vunpack.c.l.b16 %v1951
        %v1957 = vpack.c.b16 %v1954, %v1954
        %v1958 = vpack.c.b16 %v1955, %v1955
        %v1959 = vpack.c.b16 %v1956, %v1956
        %1960 = vrot.lane.b32.xlu0 %v1957, 96
        %v1961 = vpop.permute.xlu0 %1960
        %1962 = vrot.lane.b32.xlu0 %v1958, 96
        %v1963 = vpop.permute.xlu0 %1962
        %1964 = vrot.lane.b32.xlu0 %v1959, 96
        %v1965 = vpop.permute.xlu0 %1964
        %vm1969 = vcmask 1044224
        %1970 = vst.msk [vmem:[#allocation2] sm:$0xf] %vm1969, %v1961
        %1971 = vst.msk [vmem:[#allocation2 + $0x4] sm:$0xf] %vm1969, %v1963
        %1972 = vst.msk [vmem:[#allocation2 + $0x8] sm:$0xf] %vm1969, %v1965
        %v1973 = vld [vmem:[#allocation2] sm:$0xf]
        %v1974 = vld [vmem:[#allocation2 + $0x4] sm:$0xf]
        %v1975 = vld [vmem:[#allocation2 + $0x8] sm:$0xf]
        %v1976 = vld [vmem:[#allocation8] sm:$0xf]
        %v1977 = vld [vmem:[#allocation8 + $0x4] sm:$0xf]
        %v1978 = vld [vmem:[#allocation8 + $0x8] sm:$0xf]
        %v1979 = vld [vmem:[#allocation8 + $0xc] sm:$0xf]
        %v1980 = vld [vmem:[#allocation8 + $0x10] sm:$0xf]
        %v1981 = vld [vmem:[#allocation8 + $0x14] sm:$0xf]
        %v1982 = vld [vmem:[#allocation8 + $0x18] sm:$0xf]
        %v1983 = vld [vmem:[#allocation8 + $0x1c] sm:$0xf]
        %v1984 = vld [vmem:[#allocation8 + $0x20] sm:$0xf]
        %v1985 = vld [vmem:[#allocation8 + $0x24] sm:$0xf]
        %v1986 = vld [vmem:[#allocation8 + $0x28] sm:$0xf]
        %v1987 = vld [vmem:[#allocation8 + $0x2c] sm:$0xf]
        %v1988 = vld [vmem:[#allocation8 + $0x30] sm:$0xf]
        %v1989 = vld [vmem:[#allocation8 + $0x34] sm:$0xf]
        %v1990 = vld [vmem:[#allocation8 + $0x38] sm:$0xf]
        %v1991 = vld [vmem:[#allocation8 + $0x3c] sm:$0xf]
        %v1992 = vld [vmem:[%s4] sm:$0x1]
        %v1994 = vlaneseq
        %v1995 = vshrl.u32 %v1994, 7
        %v1996 = vsub.s32 0, %v1995
        %v1997 = vrot.slane %v1992, %v1996
        %v2002 = vunpack.c.l.b16 %v1973
        %v2003 = vunpack.c.l.b16 %v1974
        %v2004 = vunpack.c.l.b16 %v1975
        %v2005 = vpack.c.b16 %v2003, %v2002
        %v2006 = vpack.c.b16 %v2004, %v2004
        %v2025 = vunpack.c.l.b16 %v1976
        %v2026 = vunpack.c.l.b16 %v1977
        %v2027 = vunpack.c.l.b16 %v1978
        %v2028 = vunpack.c.l.b16 %v1979
        %v2029 = vunpack.c.l.b16 %v1980
        %v2030 = vunpack.c.l.b16 %v1981
        %v2031 = vunpack.c.l.b16 %v1982
        %v2032 = vunpack.c.l.b16 %v1983
        %v2033 = vunpack.c.l.b16 %v1984
        %v2034 = vunpack.c.l.b16 %v1985
        %v2035 = vunpack.c.l.b16 %v1986
        %v2036 = vunpack.c.l.b16 %v1987
        %v2037 = vunpack.c.l.b16 %v1988
        %v2038 = vunpack.c.l.b16 %v1989
        %v2039 = vunpack.c.l.b16 %v1990
        %v2040 = vunpack.c.l.b16 %v1991
        %v2041 = vpack.c.b16 %v2026, %v2025
        %v2042 = vpack.c.b16 %v2028, %v2027
        %v2043 = vpack.c.b16 %v2030, %v2029
        %v2044 = vpack.c.b16 %v2032, %v2031
        %v2045 = vpack.c.b16 %v2034, %v2033
        %v2046 = vpack.c.b16 %v2036, %v2035
        %v2047 = vpack.c.b16 %v2038, %v2037
        %v2048 = vpack.c.b16 %v2040, %v2039
        %2057 = vmatprep.subr.bf16.mxu0 0
        %2058 = vmatpush1.bf16.msra.mxu0 %v2048
        %2059 = vmatprep.subr.bf16.mxu0 0
        %2060 = vmatpush1.bf16.msra.mxu0 %v2047
        %2061 = vmatprep.subr.bf16.mxu0 0
        %2062 = vmatpush1.bf16.msra.mxu0 %v2046
        %2063 = vmatprep.subr.bf16.mxu0 0
        %2064 = vmatpush1.bf16.msra.mxu0 %v2045
        %2065 = vmatprep.subr.bf16.mxu0 0
        %2066 = vmatpush1.bf16.msra.mxu0 %v2044
        %2067 = vmatprep.subr.bf16.mxu0 0
        %2068 = vmatpush1.bf16.msra.mxu0 %v2043
        %2069 = vmatprep.subr.bf16.mxu0 0
        %2070 = vmatpush1.bf16.msra.mxu0 %v2042
        %2071 = vmatprep.subr.bf16.mxu0 0
        %2072 = vmatpush1.bf16.msra.mxu0 %v2041
        %2073 = vmatprep.subr.bf16.mxu0 0
        %2074 = vmatpush2.bf16.msra.mxu0 0
        %2075 = vmatprep.subr.bf16.mxu0 0
        %2076 = vmatpush2.bf16.msra.mxu0 0
        %2077 = vmatprep.subr.bf16.mxu0 0
        %2078 = vmatpush2.bf16.msra.mxu0 0
        %2079 = vmatprep.subr.bf16.mxu0 0
        %2080 = vmatpush2.bf16.msra.mxu0 0
        %2081 = vmatprep.subr.bf16.mxu0 0
        %2082 = vmatpush2.bf16.msra.mxu0 0
        %2083 = vmatprep.subr.bf16.mxu0 0
        %2084 = vmatpush2.bf16.msra.mxu0 0
        %2085 = vmatprep.subr.bf16.mxu0 0
        %2086 = vmatpush2.bf16.msra.mxu0 0
        %2087 = vmatprep.subr.bf16.mxu0 0
        %2088 = vmatpush2.bf16.msra.mxu0 0
        %2089 = vmatprep.mubr.bf16.mxu0 0
        %2090 = vmatmul.mubr.bf16.gmra.mxu0 %v2005
        %v2091 = vpop.f32.mrf.mxu0
        %v2092 = vadd.f32 %v1997, %v2091
        %v2093 = vpop.f32.mrf.mxu0
        %v2094 = vpop.f32.mrf.mxu0
        %v2095 = vadd.f32 %v1997, %v2094
        %v2096 = vpop.f32.mrf.mxu0
        %2097 = vmatprep.mubr.bf16.mxu0 0
        %2098 = vmatmul.mubr.bf16.gmra.mxu0 %v2006
        %v2099 = vpop.f32.mrf.mxu0
        %v2100 = vadd.f32 %v1997, %v2099
        %v2101 = vpop.f32.mrf.mxu0
        %v2102 = vpop.f32.mrf.mxu0
        %v2103 = vpop.f32.mrf.mxu0
        %2104 = vdwg.mxu0
        %2105 = vst [vmem:[%s271] sm:$0xff] %v2092
        %2106 = vst [vmem:[%s271 + $0x8] sm:$0xff] %v2095
        %2107 = vst [vmem:[%s271 + $0x10] sm:$0xff] %v2100
        %s2108 = sand.u32 %s141, 1
        %s2109 = scalar_lea.sflag [#allocation5], %s2108
        %s2110 = sand.u32 %s141, 1
        %s2111 = smul.addr %s2110, 24
        %s2112 = scalar_lea.vmem [#allocation9], %s2111
        // Predicated region
        $region53: #{tpu_custom_call.1} parent=39 // pred_check
          %p2113 = pneg %p151
        $region54: #{tpu_custom_call.1} parent=39 // pred_check_branch
          %2115 = sbr.rel (%p2113) target = $region56
        $region55: #{tpu_custom_call.1} parent=39 // pred_region
          %s2116 = smul.u32 3, %s23
          %s2118 = ssub.s32 384, 384
          %2119 = vsyncadd %s2109, %s2118
          %s2120 = smul.addr %s2116, 128
          %s2121 = scalar_lea.hbm %s5, %s2120
          %s2122 = sshll.u32 %s2112, 4
          %s2123 = int_to_ptr.vmem [resolvable:$true] %s2122
          %2128 = dma.vmem_to_hbm [thread:$0]  %s2123, 384, %s2121, %s2109, 128, 128, 8
        $region56: #{tpu_custom_call.1} parent=39 // pred_fallthru
          _
      $region40: #{tpu_custom_call.1} parent=5 // pred_fallthru
        _
      %p2129 = scmp.le.s32.totalorder 2, %s18
      // Predicated region
      $region57: #{tpu_custom_call.1} parent=5 // pred_check
        %p2130 = pneg %p2129
      $region58: #{tpu_custom_call.1} parent=5 // pred_check_branch
        %2132 = sbr.rel (%p2130) target = $region60
      $region59: #{tpu_custom_call.1} parent=5 // pred_region
        %s2133 = ssub.s32 %s18, 2
        // Predicated region
        $region61: #{tpu_custom_call.1} parent=59 // pred_check
          %p2134 = pneg %p157
        $region62: #{tpu_custom_call.1} parent=59 // pred_check_branch
          %2136 = sbr.rel (%p2134) target = $region64
        $region63: #{tpu_custom_call.1} parent=59 // pred_region
          %s2137 = sand.u32 %s142, 1
          %s2138 = scalar_lea.sflag [#allocation5], %s2137
          %s2139 = sand.u32 %s142, 1
          %s2140 = smul.addr %s2139, 24
          %s2141 = scalar_lea.vmem [#allocation9], %s2140
          %2142 = dma.done %s2138, 384
        $region64: #{tpu_custom_call.1} parent=59 // pred_fallthru
          _
      $region60: #{tpu_custom_call.1} parent=5 // pred_fallthru
        _
    $region6: #{tpu_custom_call.1} parent=1 // loop_footer
      %s22 = sadd.s32 1, %s18
    $region7: #{tpu_custom_call.1} parent=1 // loop_footer_branch
      %17 = sbr.rel target = $region3
    $region8: #{tpu_custom_call.1} parent=1 // loop_exit
      _
    %2143 = vsyncpa [#allocation4], 1
    %s2144 = scalar_lea.sflag [#allocation4], 1
    %2145 = vsyncpa %s2144, 1
    %2146 = vsyncpa [#allocation7], 1
    %2147 = vsyncpa [#allocation5], 1
    %s2148 = scalar_lea.sflag [#allocation5], 1
    %2149 = vsyncpa %s2148, 1

</llo_original>
